<compile_context>
chip_gen: v5e
topology: v5e:2x2
jax: 0.10.0
libtpu: 0.0.40
codegen_flags: <defaults>
</compile_context>

<pallas_src>
import functools

import jax
import jax.numpy as jnp
from jax.experimental import pallas as pl
from jax.experimental.pallas import tpu as pltpu

MATMUL_DTYPE = jnp.bfloat16   # flip to jnp.float32 for bit-accurate f32 matmuls
BT_MAX = 128                  # images per grid step (kept a multiple of 8)


def _round_up(x, m):
    return (x + m - 1) // m * m


# ---------------------------------------------------------------------------
# Fused forward kernel.  One grid step == one tile of `bt` images.
#
# In-kernel layouts (rows always carry the image index n innermost):
#   x_ref : (14*bt, 272)  rows (parity p, u, n) -> conv1 output row 2u+p of
#           image n; cols di*34 + c = padded-input row (4u+2p+di), column c.
#   c1/cc : (14*bt, 256)  lanes j*16 + oc, j = conv1 output column (j<14 real)
#   m     : ( 5*bt, 1024) rows (oh2, n); lanes di*256 + j*16 + ic
#   c2    : ( 5*bt, 160)  rows (oh2, n); lanes ow*32 + oc
#   p2    : ( 4*bt, 128)  rows (i, n);   lanes j*32 + oc     (pool2 output)
#   out   : (bt, 128)     10 logits zero-padded to one lane tile
# ---------------------------------------------------------------------------
def _forward_kernel(x_ref, e1_ref, b1e_ref, f2_ref, b2e_ref,
                    wf1_ref, bf1_ref, wf2_ref, bf2_ref, o_ref, *, bt):
    dt = MATMUL_DTYPE

    # ---- conv1 (8x8, stride 2, pad 3): one MXU matmul for all 14*bt rows.
    c1 = jnp.dot(x_ref[...], e1_ref[...], preferred_element_type=jnp.float32)
    c1 = jnp.maximum(c1 + b1e_ref[...], 0.0)                       # (14*bt, 256)

    # ---- pool1 column max: lane block j picks up column j+1 (lane rotate by
    # -16 lanes).  Junk lands only in the j>=13 lane blocks, which F2 zeroes.
    shifted = jnp.concatenate([c1[:, 16:256], c1[:, 0:16]], axis=1)
    cc = jnp.maximum(c1, shifted)                                   # (14*bt, 256)

    # ---- pool1 row max fused with the conv2 unfold: contiguous row slices
    # thanks to the (parity, u, n) row ordering (batch innermost, mult. of 8).
    ev = lambda u0: cc[u0 * bt:(u0 + 5) * bt, :]          # even rows u0..u0+4
    od = lambda u0: cc[(7 + u0) * bt:(12 + u0) * bt, :]   # odd  rows u0..u0+4
    m = jnp.concatenate(
        [jnp.maximum(ev(0), od(0)).astype(dt),   # di=0: conv1 rows (2oh2,   2oh2+1)
         jnp.maximum(od(0), ev(1)).astype(dt),   # di=1:            (2oh2+1, 2oh2+2)
         jnp.maximum(ev(1), od(1)).astype(dt),   # di=2:            (2oh2+2, 2oh2+3)
         jnp.maximum(od(1), ev(2)).astype(dt)],  # di=3:            (2oh2+3, 2oh2+4)
        axis=1)                                                     # (5*bt, 1024)

    # ---- conv2 (4x4, stride 2) as one MXU matmul + bias + ReLU.
    c2 = jnp.dot(m, f2_ref[...], preferred_element_type=jnp.float32)
    c2 = jnp.maximum(c2 + b2e_ref[...], 0.0)                        # (5*bt, 160)

    # ---- pool2 (2x2, stride 1): rows (i, i+1) then columns (j, j+1).
    r2 = jnp.maximum(c2[0:4 * bt, :], c2[bt:5 * bt, :])             # (4*bt, 160)
    p2 = jnp.maximum(r2[:, 0:128], r2[:, 32:160])                   # (4*bt, 128)

    # ---- fc1: contract the (i, j, c) flatten as 4 accumulating MXU dots
    # (avoids a sublane->lane relayout of pool2).
    wf1 = wf1_ref[...]
    h = jnp.dot(p2[0:bt, :].astype(dt), wf1[0:128, :],
                preferred_element_type=jnp.float32)
    for i in range(1, 4):
        h = h + jnp.dot(p2[i * bt:(i + 1) * bt, :].astype(dt),
                        wf1[i * 128:(i + 1) * 128, :],
                        preferred_element_type=jnp.float32)
    h1 = jnp.maximum(h + bf1_ref[...], 0.0)                         # (bt, 32)

    # ---- fc2: one dense (bt, 128) output tile (10 logits + zero padding).
    out = jnp.dot(h1.astype(dt), wf2_ref[...],
                  preferred_element_type=jnp.float32) + bf2_ref[...]
    o_ref[...] = out.astype(o_ref.dtype)


# ---------------------------------------------------------------------------
# One-shot, lane-dense data preparation (outside the kernel).
# ---------------------------------------------------------------------------
def _prep_input(x, bt, n_tiles):
    """Per-image conv1 unfold, laid out (tile, parity, u, n) x (di*34 + c)."""
    b_pad = n_tiles * bt
    xp = jnp.pad(x[:, 0], ((0, b_pad - x.shape[0]), (3, 3), (3, 3)))  # (Bp, 34, 34)
    p = jnp.arange(2)[:, None, None]
    u = jnp.arange(7)[None, :, None]
    di = jnp.arange(8)[None, None, :]
    rows = 4 * u + 2 * p + di                                   # (2, 7, 8)
    g = xp[:, rows, :]                                          # (Bp, 2, 7, 8, 34)
    g = g.reshape(n_tiles, bt, 2, 7, 272).transpose(0, 2, 3, 1, 4)
    return g.reshape(n_tiles * 14 * bt, 272).astype(MATMUL_DTYPE)


def _prep_conv1(w1, b1):
    """E1[di*34+c, j*16+oc] = w1[oc, 0, di, c-2j] for valid taps and j<14, else 0."""
    w = jnp.transpose(w1[:, 0], (1, 2, 0))                      # (di, dj, oc)
    c = jnp.arange(34)[:, None]
    j = jnp.arange(16)[None, :]
    dj = c - 2 * j                                              # (34, 16)
    valid = (dj >= 0) & (dj < 8) & (j < 14)
    e = jnp.where(valid[None, :, :, None], w[:, jnp.clip(dj, 0, 7), :], 0.0)
    e1 = e.reshape(272, 256)                                    # rows di*34+c, cols j*16+oc
    b1e = jnp.tile(b1, 16).reshape(1, 256)
    return e1.astype(MATMUL_DTYPE), b1e.astype(jnp.float32)


def _prep_conv2(w2, b2):
    """F2[di*256+j*16+ic, ow*32+oc] = w2[oc, ic, di, j-2ow] for valid taps and
    pool column j<=12 (junk / nonexistent columns are zeroed)."""
    w = jnp.transpose(w2, (2, 3, 1, 0))                         # (di, dj, ic, oc)
    j = jnp.arange(16)[:, None]
    ow = jnp.arange(5)[None, :]
    dj = j - 2 * ow                                             # (16, 5)
    valid = (dj >= 0) & (dj < 4) & (j <= 12)
    f = jnp.where(valid[None, :, :, None, None],
                  w[:, jnp.clip(dj, 0, 3)], 0.0)                # (4, 16, 5, 16, 32)
    f2 = jnp.transpose(f, (0, 1, 3, 2, 4)).reshape(1024, 160)   # rows di*256+j*16+ic
    b2e = jnp.tile(b2, 5).reshape(1, 160)
    return f2.astype(MATMUL_DTYPE), b2e.astype(jnp.float32)


def _prep_fc1(w, b):
    # kernel row i*128 + j*32 + c  <->  torch fc1 input index c*16 + i*4 + j
    wf1 = jnp.transpose(w.reshape(32, 32, 4, 4), (2, 3, 1, 0)).reshape(512, 32)
    return wf1.astype(MATMUL_DTYPE), b.reshape(1, 32).astype(jnp.float32)


def _prep_fc2(w, b):
    wf2 = jnp.zeros((32, 128), MATMUL_DTYPE).at[:, :10].set(w.T.astype(MATMUL_DTYPE))
    bf2 = jnp.zeros((1, 128), jnp.float32).at[0, :10].set(b.astype(jnp.float32))
    return wf2, bf2


# ---------------------------------------------------------------------------
# Forward pass wrapper.
# ---------------------------------------------------------------------------
def sample_conv_net(params, x):
    """SampleConvNet forward; x is NCHW float32 (B, 1, 28, 28) -> (B, 10)."""
    B = x.shape[0]
    bt = min(BT_MAX, _round_up(B, 8))        # images per grid step (multiple of 8)
    n_tiles = pl.cdiv(B, bt)
    b_pad = n_tiles * bt

    x1 = _prep_input(x, bt, n_tiles)                              # (n_tiles*14*bt, 272)
    e1, b1e = _prep_conv1(params["conv1_w"], params["conv1_b"])
    f2, b2e = _prep_conv2(params["conv2_w"], params["conv2_b"])
    wf1, bf1 = _prep_fc1(params["fc1_w"], params["fc1_b"])
    wf2, bf2 = _prep_fc2(params["fc2_w"], params["fc2_b"])

    itemsize = jnp.dtype(MATMUL_DTYPE).itemsize
    flops = 2 * b_pad * (14 * 272 * 256 + 5 * 1024 * 160 + 512 * 32 + 32 * 128)
    bytes_accessed = (b_pad * 14 * 272 * itemsize                 # unfolded input
                      + b_pad * 128 * 4                           # padded logits
                      + (272 * 256 + 1024 * 160 + 512 * 32 + 32 * 128) * itemsize
                      + (256 + 160 + 32 + 128) * 4)               # biases

    out = pl.pallas_call(
        functools.partial(_forward_kernel, bt=bt),
        out_shape=jax.ShapeDtypeStruct((b_pad, 128), jnp.float32),
        grid=(n_tiles,),
        in_specs=[
            pl.BlockSpec((14 * bt, 272), lambda b: (b, 0)),   # per-tile unfolded input
            pl.BlockSpec((272, 256), lambda b: (0, 0)),       # conv1 Toeplitz (resident)
            pl.BlockSpec((1, 256), lambda b: (0, 0)),
            pl.BlockSpec((1024, 160), lambda b: (0, 0)),      # conv2 Toeplitz (resident)
            pl.BlockSpec((1, 160), lambda b: (0, 0)),
            pl.BlockSpec((512, 32), lambda b: (0, 0)),        # fc1 (resident)
            pl.BlockSpec((1, 32), lambda b: (0, 0)),
            pl.BlockSpec((32, 128), lambda b: (0, 0)),        # fc2 (resident)
            pl.BlockSpec((1, 128), lambda b: (0, 0)),
        ],
        out_specs=pl.BlockSpec((bt, 128), lambda b: (b, 0)),
        compiler_params=pltpu.CompilerParams(
            dimension_semantics=("parallel",),    # batch tiles; megacore split on v7x
            vmem_limit_bytes=48 * 1024 * 1024,
        ),
        cost_estimate=pl.CostEstimate(
            flops=flops, transcendentals=0, bytes_accessed=bytes_accessed),
    )(x1, e1, b1e, f2, b2e, wf1, bf1, wf2, bf2)
    return out[:B, :10]


# ---------------------------------------------------------------------------
# Pure-JAX reference (numerically equivalent to the PyTorch module) + init.
# ---------------------------------------------------------------------------
def reference_forward(params, x):
    y = jax.lax.conv_general_dilated(
        x, params["conv1_w"], window_strides=(2, 2), padding=((3, 3), (3, 3)),
        dimension_numbers=("NCHW", "OIHW", "NCHW"))
    y = jax.nn.relu(y + params["conv1_b"][None, :, None, None])
    y = jax.lax.reduce_window(y, -jnp.inf, jax.lax.max, (1, 1, 2, 2),
                              (1, 1, 1, 1), "VALID")
    y = jax.lax.conv_general_dilated(
        y, params["conv2_w"], window_strides=(2, 2), padding="VALID",
        dimension_numbers=("NCHW", "OIHW", "NCHW"))
    y = jax.nn.relu(y + params["conv2_b"][None, :, None, None])
    y = jax.lax.reduce_window(y, -jnp.inf, jax.lax.max, (1, 1, 2, 2),
                              (1, 1, 1, 1), "VALID")
    y = y.reshape(y.shape[0], 32 * 4 * 4)
    y = jax.nn.relu(y @ params["fc1_w"].T + params["fc1_b"])
    return y @ params["fc2_w"].T + params["fc2_b"]


def init_params(key):
    """Deterministic synthetic init (PyTorch-style uniform bounds)."""
    ks = jax.random.split(key, 8)

    def u(k, shape, fan_in):
        bound = 1.0 / jnp.sqrt(jnp.float32(fan_in))
        return jax.random.uniform(k, shape, jnp.float32, -bound, bound)

    return {
        "conv1_w": u(ks[0], (16, 1, 8, 8), 1 * 8 * 8),
        "conv1_b": u(ks[1], (16,), 1 * 8 * 8),
        "conv2_w": u(ks[2], (32, 16, 4, 4), 16 * 4 * 4),
        "conv2_b": u(ks[3], (32,), 16 * 4 * 4),
        "fc1_w": u(ks[4], (32, 32 * 4 * 4), 32 * 4 * 4),
        "fc1_b": u(ks[5], (32,), 32 * 4 * 4),
        "fc2_w": u(ks[6], (10, 32), 32),
        "fc2_b": u(ks[7], (10,), 32),
    }


if __name__ == "__main__":
    key = jax.random.PRNGKey(0)
    k_params, k_x = jax.random.split(key)
    params = init_params(k_params)
    # 28x28 single-channel input is required by the 32*4*4 flatten in fc1.
    x = jax.random.normal(k_x, (2, 1, 28, 28), dtype=jnp.float32)

    fwd = jax.jit(sample_conv_net)
    out = jax.block_until_ready(fwd(params, x))
    assert out.shape == (2, 10)

    ref = jax.block_until_ready(reference_forward(params, x))
    tol = 1e-3 if MATMUL_DTYPE == jnp.float32 else 1e-1   # bf16 matmuls need slack
    max_err = float(jnp.max(jnp.abs(out - ref)))
    assert max_err < tol, f"kernel/reference mismatch: max abs err = {max_err}"

    print("KERNEL_OK")
</pallas_src>

<mosaic_0001>
module attributes {stable_mosaic.version = 11 : i64} {
  func.func @_forward_kernel(%arg0: i32, %arg1: memref<112x272xbf16, #tpu.memory_space<vmem>>, %arg2: memref<272x256xbf16, #tpu.memory_space<vmem>>, %arg3: memref<1x256xf32, #tpu.memory_space<vmem>>, %arg4: memref<1024x160xbf16, #tpu.memory_space<vmem>>, %arg5: memref<1x160xf32, #tpu.memory_space<vmem>>, %arg6: memref<512x32xbf16, #tpu.memory_space<vmem>>, %arg7: memref<1x32xf32, #tpu.memory_space<vmem>>, %arg8: memref<32x128xbf16, #tpu.memory_space<vmem>>, %arg9: memref<1x128xf32, #tpu.memory_space<vmem>>, %arg10: memref<8x128xf32, #tpu.memory_space<vmem>>) attributes {dimension_semantics = [#tpu.dimension_semantics<parallel>], iteration_bounds = array<i64: 1>, scalar_prefetch = 0 : i64, scratch_operands = 0 : i64, tpu.core_type = #tpu.core_type<tc>, window_params = [{transform_indices = @transform_0, window_bounds = array<i64: 112, 272>}, {pipeline_mode = #tpu.pipeline_mode<synchronous>, transform_indices = @transform_1, window_bounds = array<i64: 272, 256>}, {pipeline_mode = #tpu.pipeline_mode<synchronous>, transform_indices = @transform_2, window_bounds = array<i64: 1, 256>}, {pipeline_mode = #tpu.pipeline_mode<synchronous>, transform_indices = @transform_3, window_bounds = array<i64: 1024, 160>}, {pipeline_mode = #tpu.pipeline_mode<synchronous>, transform_indices = @transform_4, window_bounds = array<i64: 1, 160>}, {pipeline_mode = #tpu.pipeline_mode<synchronous>, transform_indices = @transform_5, window_bounds = array<i64: 512, 32>}, {pipeline_mode = #tpu.pipeline_mode<synchronous>, transform_indices = @transform_6, window_bounds = array<i64: 1, 32>}, {pipeline_mode = #tpu.pipeline_mode<synchronous>, transform_indices = @transform_7, window_bounds = array<i64: 32, 128>}, {pipeline_mode = #tpu.pipeline_mode<synchronous>, transform_indices = @transform_8, window_bounds = array<i64: 1, 128>}, {transform_indices = @transform_9, window_bounds = array<i64: 8, 128>}]} {
    %c0 = arith.constant 0 : index
    %c0_0 = arith.constant 0 : index
    %0 = vector.load %arg1[%c0, %c0_0] : memref<112x272xbf16, #tpu.memory_space<vmem>>, vector<112x272xbf16>
    %c0_1 = arith.constant 0 : index
    %c0_2 = arith.constant 0 : index
    %1 = vector.load %arg2[%c0_1, %c0_2] : memref<272x256xbf16, #tpu.memory_space<vmem>>, vector<272x256xbf16>
    %cst = arith.constant dense<0.000000e+00> : vector<112x256xf32>
    %2 = tpu.matmul %0, %1, %cst {dimension_numbers = #tpu.dot_dimension_numbers<[1], [0], [0], [1], [0, 0, 1, 1], [], []>} : vector<112x272xbf16>, vector<272x256xbf16>, vector<112x256xf32> -> vector<112x256xf32>
    %c0_3 = arith.constant 0 : index
    %c0_4 = arith.constant 0 : index
    %3 = vector.load %arg3[%c0_3, %c0_4] : memref<1x256xf32, #tpu.memory_space<vmem>>, vector<1x256xf32>
    %4 = vector.broadcast %3 : vector<1x256xf32> to vector<112x256xf32>
    %5 = arith.addf %2, %4 : vector<112x256xf32>
    %cst_5 = arith.constant 0.000000e+00 : f32
    %6 = vector.broadcast %cst_5 : f32 to vector<112x256xf32>
    %7 = arith.maximumf %5, %6 : vector<112x256xf32>
    %8 = vector.extract_strided_slice %7 {offsets = [0, 16], sizes = [112, 240], strides = [1, 1]} : vector<112x256xf32> to vector<112x240xf32>
    %9 = vector.extract_strided_slice %7 {offsets = [0, 0], sizes = [112, 16], strides = [1, 1]} : vector<112x256xf32> to vector<112x16xf32>
    %10 = tpu.concatenate %8, %9 in 1 : vector<112x240xf32>, vector<112x16xf32> -> vector<112x256xf32>
    %11 = arith.maximumf %7, %10 : vector<112x256xf32>
    %12 = vector.extract_strided_slice %11 {offsets = [0, 0], sizes = [40, 256], strides = [1, 1]} : vector<112x256xf32> to vector<40x256xf32>
    %13 = vector.extract_strided_slice %11 {offsets = [56, 0], sizes = [40, 256], strides = [1, 1]} : vector<112x256xf32> to vector<40x256xf32>
    %14 = arith.maximumf %12, %13 : vector<40x256xf32>
    %15 = arith.truncf %14 : vector<40x256xf32> to vector<40x256xbf16>
    %16 = vector.extract_strided_slice %11 {offsets = [56, 0], sizes = [40, 256], strides = [1, 1]} : vector<112x256xf32> to vector<40x256xf32>
    %17 = vector.extract_strided_slice %11 {offsets = [8, 0], sizes = [40, 256], strides = [1, 1]} : vector<112x256xf32> to vector<40x256xf32>
    %18 = arith.maximumf %16, %17 : vector<40x256xf32>
    %19 = arith.truncf %18 : vector<40x256xf32> to vector<40x256xbf16>
    %20 = vector.extract_strided_slice %11 {offsets = [8, 0], sizes = [40, 256], strides = [1, 1]} : vector<112x256xf32> to vector<40x256xf32>
    %21 = vector.extract_strided_slice %11 {offsets = [64, 0], sizes = [40, 256], strides = [1, 1]} : vector<112x256xf32> to vector<40x256xf32>
    %22 = arith.maximumf %20, %21 : vector<40x256xf32>
    %23 = arith.truncf %22 : vector<40x256xf32> to vector<40x256xbf16>
    %24 = vector.extract_strided_slice %11 {offsets = [64, 0], sizes = [40, 256], strides = [1, 1]} : vector<112x256xf32> to vector<40x256xf32>
    %25 = vector.extract_strided_slice %11 {offsets = [16, 0], sizes = [40, 256], strides = [1, 1]} : vector<112x256xf32> to vector<40x256xf32>
    %26 = arith.maximumf %24, %25 : vector<40x256xf32>
    %27 = arith.truncf %26 : vector<40x256xf32> to vector<40x256xbf16>
    %28 = tpu.concatenate %15, %19, %23, %27 in 1 : vector<40x256xbf16>, vector<40x256xbf16>, vector<40x256xbf16>, vector<40x256xbf16> -> vector<40x1024xbf16>
    %c0_6 = arith.constant 0 : index
    %c0_7 = arith.constant 0 : index
    %29 = vector.load %arg4[%c0_6, %c0_7] : memref<1024x160xbf16, #tpu.memory_space<vmem>>, vector<1024x160xbf16>
    %cst_8 = arith.constant dense<0.000000e+00> : vector<40x160xf32>
    %30 = tpu.matmul %28, %29, %cst_8 {dimension_numbers = #tpu.dot_dimension_numbers<[1], [0], [0], [1], [0, 0, 1, 1], [], []>} : vector<40x1024xbf16>, vector<1024x160xbf16>, vector<40x160xf32> -> vector<40x160xf32>
    %c0_9 = arith.constant 0 : index
    %c0_10 = arith.constant 0 : index
    %31 = vector.load %arg5[%c0_9, %c0_10] : memref<1x160xf32, #tpu.memory_space<vmem>>, vector<1x160xf32>
    %32 = vector.broadcast %31 : vector<1x160xf32> to vector<40x160xf32>
    %33 = arith.addf %30, %32 : vector<40x160xf32>
    %cst_11 = arith.constant 0.000000e+00 : f32
    %34 = vector.broadcast %cst_11 : f32 to vector<40x160xf32>
    %35 = arith.maximumf %33, %34 : vector<40x160xf32>
    %36 = vector.extract_strided_slice %35 {offsets = [0, 0], sizes = [32, 160], strides = [1, 1]} : vector<40x160xf32> to vector<32x160xf32>
    %37 = vector.extract_strided_slice %35 {offsets = [8, 0], sizes = [32, 160], strides = [1, 1]} : vector<40x160xf32> to vector<32x160xf32>
    %38 = arith.maximumf %36, %37 : vector<32x160xf32>
    %39 = vector.extract_strided_slice %38 {offsets = [0, 0], sizes = [32, 128], strides = [1, 1]} : vector<32x160xf32> to vector<32x128xf32>
    %40 = vector.extract_strided_slice %38 {offsets = [0, 32], sizes = [32, 128], strides = [1, 1]} : vector<32x160xf32> to vector<32x128xf32>
    %41 = arith.maximumf %39, %40 : vector<32x128xf32>
    %c0_12 = arith.constant 0 : index
    %c0_13 = arith.constant 0 : index
    %42 = vector.load %arg6[%c0_12, %c0_13] : memref<512x32xbf16, #tpu.memory_space<vmem>>, vector<512x32xbf16>
    %43 = vector.extract_strided_slice %41 {offsets = [0, 0], sizes = [8, 128], strides = [1, 1]} : vector<32x128xf32> to vector<8x128xf32>
    %44 = arith.truncf %43 : vector<8x128xf32> to vector<8x128xbf16>
    %45 = vector.extract_strided_slice %42 {offsets = [0, 0], sizes = [128, 32], strides = [1, 1]} : vector<512x32xbf16> to vector<128x32xbf16>
    %cst_14 = arith.constant dense<0.000000e+00> : vector<8x32xf32>
    %46 = tpu.matmul %44, %45, %cst_14 {dimension_numbers = #tpu.dot_dimension_numbers<[1], [0], [0], [1], [0, 0, 1, 1], [], []>} : vector<8x128xbf16>, vector<128x32xbf16>, vector<8x32xf32> -> vector<8x32xf32>
    %47 = vector.extract_strided_slice %41 {offsets = [8, 0], sizes = [8, 128], strides = [1, 1]} : vector<32x128xf32> to vector<8x128xf32>
    %48 = arith.truncf %47 : vector<8x128xf32> to vector<8x128xbf16>
    %49 = vector.extract_strided_slice %42 {offsets = [128, 0], sizes = [128, 32], strides = [1, 1]} : vector<512x32xbf16> to vector<128x32xbf16>
    %cst_15 = arith.constant dense<0.000000e+00> : vector<8x32xf32>
    %50 = tpu.matmul %48, %49, %cst_15 {dimension_numbers = #tpu.dot_dimension_numbers<[1], [0], [0], [1], [0, 0, 1, 1], [], []>} : vector<8x128xbf16>, vector<128x32xbf16>, vector<8x32xf32> -> vector<8x32xf32>
    %51 = arith.addf %46, %50 : vector<8x32xf32>
    %52 = vector.extract_strided_slice %41 {offsets = [16, 0], sizes = [8, 128], strides = [1, 1]} : vector<32x128xf32> to vector<8x128xf32>
    %53 = arith.truncf %52 : vector<8x128xf32> to vector<8x128xbf16>
    %54 = vector.extract_strided_slice %42 {offsets = [256, 0], sizes = [128, 32], strides = [1, 1]} : vector<512x32xbf16> to vector<128x32xbf16>
    %cst_16 = arith.constant dense<0.000000e+00> : vector<8x32xf32>
    %55 = tpu.matmul %53, %54, %cst_16 {dimension_numbers = #tpu.dot_dimension_numbers<[1], [0], [0], [1], [0, 0, 1, 1], [], []>} : vector<8x128xbf16>, vector<128x32xbf16>, vector<8x32xf32> -> vector<8x32xf32>
    %56 = arith.addf %51, %55 : vector<8x32xf32>
    %57 = vector.extract_strided_slice %41 {offsets = [24, 0], sizes = [8, 128], strides = [1, 1]} : vector<32x128xf32> to vector<8x128xf32>
    %58 = arith.truncf %57 : vector<8x128xf32> to vector<8x128xbf16>
    %59 = vector.extract_strided_slice %42 {offsets = [384, 0], sizes = [128, 32], strides = [1, 1]} : vector<512x32xbf16> to vector<128x32xbf16>
    %cst_17 = arith.constant dense<0.000000e+00> : vector<8x32xf32>
    %60 = tpu.matmul %58, %59, %cst_17 {dimension_numbers = #tpu.dot_dimension_numbers<[1], [0], [0], [1], [0, 0, 1, 1], [], []>} : vector<8x128xbf16>, vector<128x32xbf16>, vector<8x32xf32> -> vector<8x32xf32>
    %61 = arith.addf %56, %60 : vector<8x32xf32>
    %c0_18 = arith.constant 0 : index
    %c0_19 = arith.constant 0 : index
    %62 = vector.load %arg7[%c0_18, %c0_19] : memref<1x32xf32, #tpu.memory_space<vmem>>, vector<1x32xf32>
    %63 = vector.broadcast %62 : vector<1x32xf32> to vector<8x32xf32>
    %64 = arith.addf %61, %63 : vector<8x32xf32>
    %cst_20 = arith.constant 0.000000e+00 : f32
    %65 = vector.broadcast %cst_20 : f32 to vector<8x32xf32>
    %66 = arith.maximumf %64, %65 : vector<8x32xf32>
    %67 = arith.truncf %66 : vector<8x32xf32> to vector<8x32xbf16>
    %c0_21 = arith.constant 0 : index
    %c0_22 = arith.constant 0 : index
    %68 = vector.load %arg8[%c0_21, %c0_22] : memref<32x128xbf16, #tpu.memory_space<vmem>>, vector<32x128xbf16>
    %cst_23 = arith.constant dense<0.000000e+00> : vector<8x128xf32>
    %69 = tpu.matmul %67, %68, %cst_23 {dimension_numbers = #tpu.dot_dimension_numbers<[1], [0], [0], [1], [0, 0, 1, 1], [], []>} : vector<8x32xbf16>, vector<32x128xbf16>, vector<8x128xf32> -> vector<8x128xf32>
    %c0_24 = arith.constant 0 : index
    %c0_25 = arith.constant 0 : index
    %70 = vector.load %arg9[%c0_24, %c0_25] : memref<1x128xf32, #tpu.memory_space<vmem>>, vector<1x128xf32>
    %71 = vector.broadcast %70 : vector<1x128xf32> to vector<8x128xf32>
    %72 = arith.addf %69, %71 : vector<8x128xf32>
    %c0_26 = arith.constant 0 : index
    %c0_27 = arith.constant 0 : index
    %73 = vector.load %arg10[%c0_26, %c0_27] : memref<8x128xf32, #tpu.memory_space<vmem>>, vector<8x128xf32>
    tpu.vector_store %arg10[%c0_26, %c0_27], %72 {strides = array<i32>} : memref<8x128xf32, #tpu.memory_space<vmem>>, vector<8x128xf32>,
    return
  }
  func.func @transform_0(%arg0: i32) -> (i32, i32) {
    %c0_i32 = arith.constant 0 : i32
    %c0_i32_0 = arith.constant 0 : i32
    return %arg0, %c0_i32 : i32, i32
  }
  func.func @transform_1(%arg0: i32) -> (i32, i32) {
    %c0_i32 = arith.constant 0 : i32
    %c0_i32_0 = arith.constant 0 : i32
    %c0_i32_1 = arith.constant 0 : i32
    return %c0_i32, %c0_i32_0 : i32, i32
  }
  func.func @transform_2(%arg0: i32) -> (i32, i32) {
    %c0_i32 = arith.constant 0 : i32
    %c0_i32_0 = arith.constant 0 : i32
    %c0_i32_1 = arith.constant 0 : i32
    return %c0_i32, %c0_i32_0 : i32, i32
  }
  func.func @transform_3(%arg0: i32) -> (i32, i32) {
    %c0_i32 = arith.constant 0 : i32
    %c0_i32_0 = arith.constant 0 : i32
    %c0_i32_1 = arith.constant 0 : i32
    return %c0_i32, %c0_i32_0 : i32, i32
  }
  func.func @transform_4(%arg0: i32) -> (i32, i32) {
    %c0_i32 = arith.constant 0 : i32
    %c0_i32_0 = arith.constant 0 : i32
    %c0_i32_1 = arith.constant 0 : i32
    return %c0_i32, %c0_i32_0 : i32, i32
  }
  func.func @transform_5(%arg0: i32) -> (i32, i32) {
    %c0_i32 = arith.constant 0 : i32
    %c0_i32_0 = arith.constant 0 : i32
    %c0_i32_1 = arith.constant 0 : i32
    return %c0_i32, %c0_i32_0 : i32, i32
  }
  func.func @transform_6(%arg0: i32) -> (i32, i32) {
    %c0_i32 = arith.constant 0 : i32
    %c0_i32_0 = arith.constant 0 : i32
    %c0_i32_1 = arith.constant 0 : i32
    return %c0_i32, %c0_i32_0 : i32, i32
  }
  func.func @transform_7(%arg0: i32) -> (i32, i32) {
    %c0_i32 = arith.constant 0 : i32
    %c0_i32_0 = arith.constant 0 : i32
    %c0_i32_1 = arith.constant 0 : i32
    return %c0_i32, %c0_i32_0 : i32, i32
  }
  func.func @transform_8(%arg0: i32) -> (i32, i32) {
    %c0_i32 = arith.constant 0 : i32
    %c0_i32_0 = arith.constant 0 : i32
    %c0_i32_1 = arith.constant 0 : i32
    return %c0_i32, %c0_i32_0 : i32, i32
  }
  func.func @transform_9(%arg0: i32) -> (i32, i32) {
    %c0_i32 = arith.constant 0 : i32
    %c0_i32_0 = arith.constant 0 : i32
    return %arg0, %c0_i32 : i32, i32
  }
}

</mosaic_0001>

<llo_original>
// kernel: tile.13
$region0: #{tile.13}
  #allocation0 [shape = 's32[1]{0}', space=sflag, size = 0x4, scoped, tag = 'scoped memory for tile.13']
  %s0 = inlined_call_operand.vmem [shape: f32[16], index: 0, kind: input, shape index: {}]
  %s1 = inlined_call_operand.vmem [shape: f32[16,16], index: 1, kind: output, shape index: {}]
  // Predicated region
  $region2: #{tile.13} parent=0 // pred_check
    _
  $region3: #{tile.13} parent=0 // pred_check_branch
    %3 = sbr.rel (0) target = $region5
  $region4: #{tile.13} parent=0 // pred_region
    _
  $region5: #{tile.13} parent=0 // pred_fallthru
    _
  %v4 = vld [vmem:[%s0] ss:$0 sm:$0xff]
  %5 = vst [vmem:[%s1] sm:$0xff] %v4
  %s6 = scalar_lea.vmem %s1, 8
  %7 = vst [vmem:[%s6] sm:$0xff] %v4

// kernel: tile.14
$region0: #{tile.14}
  %s0 = inlined_call_operand.vmem [shape: f32[16,16], index: 0, kind: input, shape index: {}]
  %s1 = inlined_call_operand.vmem [shape: f32[1,256], index: 1, kind: output, shape index: {}]
  $region1: #{tile.14} parent=0
    #allocation0 [shape = 'u8[8192]{0}', space=vmem, size = 0x2000, scoped, tag = 'scoped mem for output reshape']
    %s2 = smov 3
    %v3 = vld [vmem:[%s0] ss:$8 sm:%s2]
    %vm4 = vcmask 130048
    %5 = vst.msk [vmem:[#allocation0] ss:$8 sm:$0x3] %vm4, %v3
    %s6 = scalar_lea.vmem %s0, 7
    %s7 = smov 3
    %v8 = vld [vmem:[%s6] ss:$8 sm:%s7]
    %9 = vrot.lane.b32.xlu0 %v8, 112
    %v10 = vpop.permute.xlu0 %9
    %vm11 = vcmask 1048448
    %12 = vst.msk [vmem:[#allocation0] ss:$8 sm:$0x3] %vm11, %v10
    %s13 = scalar_lea.vmem %s0, 6
    %s14 = smov 3
    %v15 = vld [vmem:[%s13] ss:$8 sm:%s14]
    %16 = vrot.lane.b32.xlu0 %v15, 96
    %v17 = vpop.permute.xlu0 %16
    %vm18 = vcmask 917248
    %19 = vst.msk [vmem:[#allocation0] ss:$8 sm:$0x3] %vm18, %v17
    %s20 = scalar_lea.vmem %s0, 5
    %s21 = smov 3
    %v22 = vld [vmem:[%s20] ss:$8 sm:%s21]
    %23 = vrot.lane.b32.xlu0 %v22, 80
    %v24 = vpop.permute.xlu0 %23
    %vm25 = vcmask 786048
    %26 = vst.msk [vmem:[#allocation0] ss:$8 sm:$0x3] %vm25, %v24
    %s27 = scalar_lea.vmem %s0, 4
    %s28 = smov 3
    %v29 = vld [vmem:[%s27] ss:$8 sm:%s28]
    %30 = vrot.lane.b32.xlu0 %v29, 64
    %v31 = vpop.permute.xlu0 %30
    %vm32 = vcmask 654848
    %33 = vst.msk [vmem:[#allocation0] ss:$8 sm:$0x3] %vm32, %v31
    %s34 = scalar_lea.vmem %s0, 3
    %s35 = smov 3
    %v36 = vld [vmem:[%s34] ss:$8 sm:%s35]
    %37 = vrot.lane.b32.xlu0 %v36, 48
    %v38 = vpop.permute.xlu0 %37
    %vm39 = vcmask 523648
    %40 = vst.msk [vmem:[#allocation0] ss:$8 sm:$0x3] %vm39, %v38
    %s41 = scalar_lea.vmem %s0, 2
    %s42 = smov 3
    %v43 = vld [vmem:[%s41] ss:$8 sm:%s42]
    %44 = vrot.lane.b32.xlu0 %v43, 32
    %v45 = vpop.permute.xlu0 %44
    %vm46 = vcmask 392448
    %47 = vst.msk [vmem:[#allocation0] ss:$8 sm:$0x3] %vm46, %v45
    %s48 = scalar_lea.vmem %s0, 1
    %s49 = smov 3
    %v50 = vld [vmem:[%s48] ss:$8 sm:%s49]
    %51 = vrot.lane.b32.xlu0 %v50, 16
    %v52 = vpop.permute.xlu0 %51
    %vm53 = vcmask 261248
    %54 = vst.msk [vmem:[#allocation0] ss:$8 sm:$0x3] %vm53, %v52
    %s56 = ssub.s32 2, 1
    %v57 = vld [vmem:[#allocation0] sm:%s56]
    %s59 = ssub.s32 2, 1
    %60 = vst [vmem:[%s1] sm:%s59] %v57
    %s61 = scalar_lea.vmem [#allocation0], 8
    %v62 = vld [vmem:[%s61] sm:%s56]
    %s64 = ssub.s32 2, 1
    %s65 = scalar_lea.vmem %s1, 1
    %66 = vst [vmem:[%s65] sm:%s64] %v62

// kernel: tile.18
$region0: #{tile.18}
  #allocation0 [shape = 's32[1]{0}', space=sflag, size = 0x4, scoped, tag = 'scoped memory for tile.18']
  %s0 = inlined_call_operand.vmem [shape: f32[32], index: 0, kind: input, shape index: {}]
  %s1 = inlined_call_operand.vmem [shape: f32[5,32], index: 1, kind: output, shape index: {}]
  // Predicated region
  $region2: #{tile.18} parent=0 // pred_check
    _
  $region3: #{tile.18} parent=0 // pred_check_branch
    %3 = sbr.rel (0) target = $region5
  $region4: #{tile.18} parent=0 // pred_region
    _
  $region5: #{tile.18} parent=0 // pred_fallthru
    _
  %v4 = vld [vmem:[%s0] ss:$0 sm:$0xff]
  %5 = vst [vmem:[%s1] sm:$0xff] %v4

// kernel: tile.19
$region0: #{tile.19}
  %s0 = inlined_call_operand.vmem [shape: f32[5,32], index: 0, kind: input, shape index: {}]
  %s1 = inlined_call_operand.vmem [shape: f32[1,160], index: 1, kind: output, shape index: {}]
  $region1: #{tile.19} parent=0
    #allocation0 [shape = 'u8[8192]{0}', space=vmem, size = 0x2000, scoped, tag = 'scoped mem for output reshape']
    %s2 = smov 3
    %v3 = vld [vmem:[%s0] ss:$4 sm:%s2]
    %vm4 = vcmask 261120
    %5 = vst.msk [vmem:[#allocation0] ss:$8 sm:$0x3] %vm4, %v3
    %s6 = scalar_lea.vmem %s0, 3
    %v7 = vld [vmem:[%s6] sm:$0x1]
    %8 = vrot.lane.b32.xlu0 %v7, 96
    %v9 = vpop.permute.xlu0 %8
    %vm10 = vcmask 1048320
    %11 = vst.msk [vmem:[#allocation0] sm:$0x1] %vm10, %v9
    %s12 = scalar_lea.vmem %s0, 2
    %v13 = vld [vmem:[%s12] sm:$0x1]
    %14 = vrot.lane.b32.xlu0 %v13, 64
    %v15 = vpop.permute.xlu0 %14
    %vm16 = vcmask 785920
    %17 = vst.msk [vmem:[#allocation0] sm:$0x1] %vm16, %v15
    %s18 = scalar_lea.vmem %s0, 1
    %v19 = vld [vmem:[%s18] sm:$0x1]
    %20 = vrot.lane.b32.xlu0 %v19, 32
    %v21 = vpop.permute.xlu0 %20
    %vm22 = vcmask 523520
    %23 = vst.msk [vmem:[#allocation0] sm:$0x1] %vm22, %v21
    %s25 = ssub.s32 2, 1
    %v26 = vld [vmem:[#allocation0] sm:%s25]
    %s28 = ssub.s32 2, 1
    %29 = vst [vmem:[%s1] sm:%s28] %v26
    %s30 = scalar_lea.vmem [#allocation0], 8
    %v31 = vld [vmem:[%s30] sm:%s25]
    %s33 = ssub.s32 2, 1
    %s34 = scalar_lea.vmem %s1, 1
    %35 = vst [vmem:[%s34] sm:%s33] %v31

// kernel: sample_conv_net.1
$region0: #{sample_conv_net.1}
  #allocation0 [shape = 'u32[]', space=smem, size = 0x4, offset = 0x4, fixed_abs, tag = 'smem constant byte address 0x4 - core index']
  #allocation1 [shape = 'u32[72,128]{1,0:T(1,128)}', space=vmem, size = 0x9000, scoped, tag = 'internal scratch']
  %s0 = inlined_call_operand.vmem [shape: bf16[112,272], index: 0, kind: input, shape index: {}]
  %s1 = inlined_call_operand.vmem [shape: bf16[272,256], index: 1, kind: input, shape index: {}]
  %s2 = inlined_call_operand.vmem [shape: f32[1,256], index: 2, kind: input, shape index: {}]
  %s3 = inlined_call_operand.vmem [shape: bf16[1024,160], index: 3, kind: input, shape index: {}]
  %s4 = inlined_call_operand.vmem [shape: f32[1,160], index: 4, kind: input, shape index: {}]
  %s5 = inlined_call_operand.vmem [shape: bf16[512,32], index: 5, kind: input, shape index: {}]
  %s6 = inlined_call_operand.vmem [shape: f32[1,32], index: 6, kind: input, shape index: {}]
  %s7 = inlined_call_operand.vmem [shape: bf16[32,128], index: 7, kind: input, shape index: {}]
  %s8 = inlined_call_operand.vmem [shape: f32[1,128], index: 8, kind: input, shape index: {}]
  %s9 = inlined_call_operand.vmem [shape: f32[8,128], index: 9, kind: output, shape index: {}]
  %s10 = sld [smem:[#allocation0]]
  $region46: #{sample_conv_net.1} parent=0
    _
  %s12 = ssub.s32 1, %s10
  %s13 = scalar_select 0, %s12, %s10
  // Predicated region
  $region2: #{sample_conv_net.1} parent=0 // pred_check
    _
  $region3: #{sample_conv_net.1} parent=0 // pred_check_branch
    %15 = sbr.rel (0) target = $region5
  $region4: #{sample_conv_net.1} parent=0 // pred_region
    _
  $region5: #{sample_conv_net.1} parent=0 // pred_fallthru
    _
  // Predicated region
  $region6: #{sample_conv_net.1} parent=0 // pred_check
    _
  $region7: #{sample_conv_net.1} parent=0 // pred_check_branch
    %17 = sbr.rel (0) target = $region9
  $region8: #{sample_conv_net.1} parent=0 // pred_region
    _
  $region9: #{sample_conv_net.1} parent=0 // pred_fallthru
    _
  // Predicated region
  $region10: #{sample_conv_net.1} parent=0 // pred_check
    _
  $region11: #{sample_conv_net.1} parent=0 // pred_check_branch
    %19 = sbr.rel (0) target = $region13
  $region12: #{sample_conv_net.1} parent=0 // pred_region
    _
  $region13: #{sample_conv_net.1} parent=0 // pred_fallthru
    _
  // Predicated region
  $region14: #{sample_conv_net.1} parent=0 // pred_check
    _
  $region15: #{sample_conv_net.1} parent=0 // pred_check_branch
    %21 = sbr.rel (0) target = $region17
  $region16: #{sample_conv_net.1} parent=0 // pred_region
    _
  $region17: #{sample_conv_net.1} parent=0 // pred_fallthru
    _
  // Predicated region
  $region18: #{sample_conv_net.1} parent=0 // pred_check
    _
  $region19: #{sample_conv_net.1} parent=0 // pred_check_branch
    %23 = sbr.rel (0) target = $region21
  $region20: #{sample_conv_net.1} parent=0 // pred_region
    _
  $region21: #{sample_conv_net.1} parent=0 // pred_fallthru
    _
  // Predicated region
  $region22: #{sample_conv_net.1} parent=0 // pred_check
    _
  $region23: #{sample_conv_net.1} parent=0 // pred_check_branch
    %25 = sbr.rel (0) target = $region25
  $region24: #{sample_conv_net.1} parent=0 // pred_region
    _
  $region25: #{sample_conv_net.1} parent=0 // pred_fallthru
    _
  // Predicated region
  $region26: #{sample_conv_net.1} parent=0 // pred_check
    _
  $region27: #{sample_conv_net.1} parent=0 // pred_check_branch
    %27 = sbr.rel (0) target = $region29
  $region28: #{sample_conv_net.1} parent=0 // pred_region
    _
  $region29: #{sample_conv_net.1} parent=0 // pred_fallthru
    _
  // Predicated region
  $region30: #{sample_conv_net.1} parent=0 // pred_check
    _
  $region31: #{sample_conv_net.1} parent=0 // pred_check_branch
    %29 = sbr.rel (0) target = $region33
  $region32: #{sample_conv_net.1} parent=0 // pred_region
    _
  $region33: #{sample_conv_net.1} parent=0 // pred_fallthru
    _
  // Predicated region
  $region34: #{sample_conv_net.1} parent=0 // pred_check
    _
  $region35: #{sample_conv_net.1} parent=0 // pred_check_branch
    %31 = sbr.rel (0) target = $region37
  $region36: #{sample_conv_net.1} parent=0 // pred_region
    _
  $region37: #{sample_conv_net.1} parent=0 // pred_fallthru
    _
  %v33 = vld [vmem:[%s0] sm:$0xff]
  %v34 = vld [vmem:[%s0 + $0x8] sm:$0xf]
  %v35 = vld [vmem:[%s0 + $0xc] sm:$0xff]
  %v36 = vld [vmem:[%s0 + $0x14] sm:$0xf]
  %v37 = vld [vmem:[%s0 + $0x18] sm:$0xff]
  %v38 = vld [vmem:[%s0 + $0x20] sm:$0xf]
  %v39 = vld [vmem:[%s0 + $0x24] sm:$0xff]
  %v40 = vld [vmem:[%s0 + $0x2c] sm:$0xf]
  %v41 = vld [vmem:[%s0 + $0x30] sm:$0xff]
  %v42 = vld [vmem:[%s0 + $0x38] sm:$0xf]
  %v43 = vld [vmem:[%s0 + $0x3c] sm:$0xff]
  %v44 = vld [vmem:[%s0 + $0x44] sm:$0xf]
  %v45 = vld [vmem:[%s0 + $0x48] sm:$0xff]
  %v46 = vld [vmem:[%s0 + $0x50] sm:$0xf]
  %v47 = vld [vmem:[%s0 + $0x54] sm:$0xff]
  %v48 = vld [vmem:[%s0 + $0x5c] sm:$0xf]
  %v49 = vld [vmem:[%s0 + $0x60] sm:$0xff]
  %v50 = vld [vmem:[%s0 + $0x68] sm:$0xf]
  %v51 = vld [vmem:[%s0 + $0x6c] sm:$0xff]
  %v52 = vld [vmem:[%s0 + $0x74] sm:$0xf]
  %v53 = vld [vmem:[%s0 + $0x78] sm:$0xff]
  %v54 = vld [vmem:[%s0 + $0x80] sm:$0xf]
  %v55 = vld [vmem:[%s0 + $0x84] sm:$0xff]
  %v56 = vld [vmem:[%s0 + $0x8c] sm:$0xf]
  %v57 = vld [vmem:[%s0 + $0x90] sm:$0xff]
  %v58 = vld [vmem:[%s0 + $0x98] sm:$0xf]
  %v59 = vld [vmem:[%s0 + $0x9c] sm:$0xff]
  %v60 = vld [vmem:[%s0 + $0xa4] sm:$0xf]
  %v61 = vld [vmem:[%s1] sm:$0xff]
  %v62 = vld [vmem:[%s1 + $0x8] sm:$0xff]
  %v63 = vld [vmem:[%s1 + $0x10] sm:$0xff]
  %v64 = vld [vmem:[%s1 + $0x18] sm:$0xff]
  %v65 = vld [vmem:[%s1 + $0x20] sm:$0xff]
  %v66 = vld [vmem:[%s1 + $0x28] sm:$0xff]
  %v67 = vld [vmem:[%s1 + $0x30] sm:$0xff]
  %v68 = vld [vmem:[%s1 + $0x38] sm:$0xff]
  %v69 = vld [vmem:[%s1 + $0x40] sm:$0xff]
  %v70 = vld [vmem:[%s1 + $0x48] sm:$0xff]
  %v71 = vld [vmem:[%s1 + $0x50] sm:$0xff]
  %v72 = vld [vmem:[%s1 + $0x58] sm:$0xff]
  %v73 = vld [vmem:[%s1 + $0x60] sm:$0xff]
  %v74 = vld [vmem:[%s1 + $0x68] sm:$0xff]
  %v75 = vld [vmem:[%s1 + $0x70] sm:$0xff]
  %v76 = vld [vmem:[%s1 + $0x78] sm:$0xff]
  %v77 = vld [vmem:[%s1 + $0x80] sm:$0xff]
  %v78 = vld [vmem:[%s1 + $0x88] sm:$0xff]
  %v79 = vld [vmem:[%s1 + $0x90] sm:$0xff]
  %v80 = vld [vmem:[%s1 + $0x98] sm:$0xff]
  %v81 = vld [vmem:[%s1 + $0xa0] sm:$0xff]
  %v82 = vld [vmem:[%s1 + $0xa8] sm:$0xff]
  %v83 = vld [vmem:[%s1 + $0xb0] sm:$0xff]
  %v84 = vld [vmem:[%s1 + $0xb8] sm:$0xff]
  %v85 = vld [vmem:[%s1 + $0xc0] sm:$0xff]
  %v86 = vld [vmem:[%s1 + $0xc8] sm:$0xff]
  %v87 = vld [vmem:[%s1 + $0xd0] sm:$0xff]
  %v88 = vld [vmem:[%s1 + $0xd8] sm:$0xff]
  %v89 = vld [vmem:[%s1 + $0xe0] sm:$0xff]
  %v90 = vld [vmem:[%s1 + $0xe8] sm:$0xff]
  %v91 = vld [vmem:[%s1 + $0xf0] sm:$0xff]
  %v92 = vld [vmem:[%s1 + $0xf8] sm:$0xff]
  %v93 = vld [vmem:[%s1 + $0x100] sm:$0xff]
  %v94 = vld [vmem:[%s1 + $0x108] sm:$0xff]
  %v95 = vld [vmem:[%s2] sm:$0x3]
  %v97 = vperm.slane %v95, 0
  %v98 = vperm.slane %v95, 1
  %v129 = vunpack.c.l.b16 %v33
  %v130 = vunpack.c.h.b16 %v33
  %v131 = vunpack.c.l.b16 %v34
  %v132 = vunpack.c.l.b16 %v35
  %v133 = vunpack.c.h.b16 %v35
  %v134 = vunpack.c.l.b16 %v36
  %v135 = vunpack.c.l.b16 %v37
  %v136 = vunpack.c.h.b16 %v37
  %v137 = vunpack.c.l.b16 %v38
  %v138 = vunpack.c.l.b16 %v39
  %v139 = vunpack.c.h.b16 %v39
  %v140 = vunpack.c.l.b16 %v40
  %v141 = vunpack.c.l.b16 %v41
  %v142 = vunpack.c.h.b16 %v41
  %v143 = vunpack.c.l.b16 %v42
  %v144 = vunpack.c.l.b16 %v43
  %v145 = vunpack.c.h.b16 %v43
  %v146 = vunpack.c.l.b16 %v44
  %v147 = vunpack.c.l.b16 %v45
  %v148 = vunpack.c.h.b16 %v45
  %v149 = vunpack.c.l.b16 %v46
  %v150 = vunpack.c.l.b16 %v47
  %v151 = vunpack.c.h.b16 %v47
  %v152 = vunpack.c.l.b16 %v48
  %v153 = vunpack.c.l.b16 %v49
  %v154 = vunpack.c.h.b16 %v49
  %v155 = vunpack.c.l.b16 %v50
  %v156 = vunpack.c.l.b16 %v51
  %v157 = vunpack.c.h.b16 %v51
  %v158 = vunpack.c.l.b16 %v52
  %v159 = vunpack.c.l.b16 %v53
  %v160 = vunpack.c.h.b16 %v53
  %v161 = vunpack.c.l.b16 %v54
  %v162 = vunpack.c.l.b16 %v55
  %v163 = vunpack.c.h.b16 %v55
  %v164 = vunpack.c.l.b16 %v56
  %v165 = vunpack.c.l.b16 %v57
  %v166 = vunpack.c.h.b16 %v57
  %v167 = vunpack.c.l.b16 %v58
  %v168 = vunpack.c.l.b16 %v59
  %v169 = vunpack.c.h.b16 %v59
  %v170 = vunpack.c.l.b16 %v60
  %v171 = vpack.c.b16 %v132, %v129
  %v172 = vpack.c.b16 %v133, %v130
  %v173 = vpack.c.b16 %v134, %v131
  %v174 = vpack.c.b16 %v138, %v135
  %v175 = vpack.c.b16 %v139, %v136
  %v176 = vpack.c.b16 %v140, %v137
  %v177 = vpack.c.b16 %v144, %v141
  %v178 = vpack.c.b16 %v145, %v142
  %v179 = vpack.c.b16 %v146, %v143
  %v180 = vpack.c.b16 %v150, %v147
  %v181 = vpack.c.b16 %v151, %v148
  %v182 = vpack.c.b16 %v152, %v149
  %v183 = vpack.c.b16 %v156, %v153
  %v184 = vpack.c.b16 %v157, %v154
  %v185 = vpack.c.b16 %v158, %v155
  %v186 = vpack.c.b16 %v162, %v159
  %v187 = vpack.c.b16 %v163, %v160
  %v188 = vpack.c.b16 %v164, %v161
  %v189 = vpack.c.b16 %v168, %v165
  %v190 = vpack.c.b16 %v169, %v166
  %v191 = vpack.c.b16 %v170, %v167
  %v240 = vunpack.c.l.b16 %v61
  %v241 = vunpack.c.h.b16 %v61
  %v242 = vunpack.c.l.b16 %v62
  %v243 = vunpack.c.h.b16 %v62
  %v244 = vunpack.c.l.b16 %v63
  %v245 = vunpack.c.h.b16 %v63
  %v246 = vunpack.c.l.b16 %v64
  %v247 = vunpack.c.h.b16 %v64
  %v248 = vunpack.c.l.b16 %v65
  %v249 = vunpack.c.h.b16 %v65
  %v250 = vunpack.c.l.b16 %v66
  %v251 = vunpack.c.h.b16 %v66
  %v252 = vunpack.c.l.b16 %v67
  %v253 = vunpack.c.h.b16 %v67
  %v254 = vunpack.c.l.b16 %v68
  %v255 = vunpack.c.h.b16 %v68
  %v256 = vunpack.c.l.b16 %v69
  %v257 = vunpack.c.h.b16 %v69
  %v258 = vunpack.c.l.b16 %v70
  %v259 = vunpack.c.h.b16 %v70
  %v260 = vunpack.c.l.b16 %v71
  %v261 = vunpack.c.h.b16 %v71
  %v262 = vunpack.c.l.b16 %v72
  %v263 = vunpack.c.h.b16 %v72
  %v264 = vunpack.c.l.b16 %v73
  %v265 = vunpack.c.h.b16 %v73
  %v266 = vunpack.c.l.b16 %v74
  %v267 = vunpack.c.h.b16 %v74
  %v268 = vunpack.c.l.b16 %v75
  %v269 = vunpack.c.h.b16 %v75
  %v270 = vunpack.c.l.b16 %v76
  %v271 = vunpack.c.h.b16 %v76
  %v272 = vunpack.c.l.b16 %v77
  %v273 = vunpack.c.h.b16 %v77
  %v274 = vunpack.c.l.b16 %v78
  %v275 = vunpack.c.h.b16 %v78
  %v276 = vunpack.c.l.b16 %v79
  %v277 = vunpack.c.h.b16 %v79
  %v278 = vunpack.c.l.b16 %v80
  %v279 = vunpack.c.h.b16 %v80
  %v280 = vunpack.c.l.b16 %v81
  %v281 = vunpack.c.h.b16 %v81
  %v282 = vunpack.c.l.b16 %v82
  %v283 = vunpack.c.h.b16 %v82
  %v284 = vunpack.c.l.b16 %v83
  %v285 = vunpack.c.h.b16 %v83
  %v286 = vunpack.c.l.b16 %v84
  %v287 = vunpack.c.h.b16 %v84
  %v288 = vunpack.c.l.b16 %v85
  %v289 = vunpack.c.h.b16 %v85
  %v290 = vunpack.c.l.b16 %v86
  %v291 = vunpack.c.h.b16 %v86
  %v292 = vunpack.c.l.b16 %v87
  %v293 = vunpack.c.h.b16 %v87
  %v294 = vunpack.c.l.b16 %v88
  %v295 = vunpack.c.h.b16 %v88
  %v296 = vunpack.c.l.b16 %v89
  %v297 = vunpack.c.h.b16 %v89
  %v298 = vunpack.c.l.b16 %v90
  %v299 = vunpack.c.h.b16 %v90
  %v300 = vunpack.c.l.b16 %v91
  %v301 = vunpack.c.h.b16 %v91
  %v302 = vunpack.c.l.b16 %v92
  %v303 = vunpack.c.h.b16 %v92
  %v304 = vunpack.c.l.b16 %v93
  %v305 = vunpack.c.h.b16 %v93
  %v306 = vunpack.c.l.b16 %v94
  %v307 = vunpack.c.h.b16 %v94
  %v308 = vpack.c.b16 %v242, %v240
  %v309 = vpack.c.b16 %v243, %v241
  %v310 = vpack.c.b16 %v246, %v244
  %v311 = vpack.c.b16 %v247, %v245
  %v312 = vpack.c.b16 %v250, %v248
  %v313 = vpack.c.b16 %v251, %v249
  %v314 = vpack.c.b16 %v254, %v252
  %v315 = vpack.c.b16 %v255, %v253
  %v316 = vpack.c.b16 %v258, %v256
  %v317 = vpack.c.b16 %v259, %v257
  %v318 = vpack.c.b16 %v262, %v260
  %v319 = vpack.c.b16 %v263, %v261
  %v320 = vpack.c.b16 %v266, %v264
  %v321 = vpack.c.b16 %v267, %v265
  %v322 = vpack.c.b16 %v270, %v268
  %v323 = vpack.c.b16 %v271, %v269
  %v324 = vpack.c.b16 %v274, %v272
  %v325 = vpack.c.b16 %v275, %v273
  %v326 = vpack.c.b16 %v278, %v276
  %v327 = vpack.c.b16 %v279, %v277
  %v328 = vpack.c.b16 %v282, %v280
  %v329 = vpack.c.b16 %v283, %v281
  %v330 = vpack.c.b16 %v286, %v284
  %v331 = vpack.c.b16 %v287, %v285
  %v332 = vpack.c.b16 %v290, %v288
  %v333 = vpack.c.b16 %v291, %v289
  %v334 = vpack.c.b16 %v294, %v292
  %v335 = vpack.c.b16 %v295, %v293
  %v336 = vpack.c.b16 %v298, %v296
  %v337 = vpack.c.b16 %v299, %v297
  %v338 = vpack.c.b16 %v302, %v300
  %v339 = vpack.c.b16 %v303, %v301
  %v340 = vpack.c.b16 %v306, %v304
  %v341 = vpack.c.b16 %v307, %v305
  %vm376 = vcmask 130048
  %v378 = vsel %vm376, %v173, 0
  %v381 = vsel %vm376, %v176, 0
  %v384 = vsel %vm376, %v179, 0
  %v387 = vsel %vm376, %v182, 0
  %v390 = vsel %vm376, %v185, 0
  %v393 = vsel %vm376, %v188, 0
  %v396 = vsel %vm376, %v191, 0
  %398 = vmatpush.bf16.msra.mxu0 %v322
  %399 = vmatpush.bf16.msra.mxu0 %v320
  %400 = vmatpush.bf16.msra.mxu0 %v318
  %401 = vmatpush.bf16.msra.mxu0 %v316
  %402 = vmatpush.bf16.msra.mxu0 %v314
  %403 = vmatpush.bf16.msra.mxu0 %v312
  %404 = vmatpush.bf16.msra.mxu0 %v310
  %405 = vmatpush.bf16.msra.mxu0 %v308
  %406 = vmatmul.bf16.gmra.mxu0 %v171
  %v407 = vpop.f32.mrf.mxu0
  %v408 = vadd.f32 %v97, %v407
  %v409 = vpop.f32.mrf.mxu0
  %v410 = vadd.f32 %v97, %v409
  %411 = vmatmul.bf16.gmra.mxu0 %v174
  %v412 = vpop.f32.mrf.mxu0
  %v413 = vadd.f32 %v97, %v412
  %v414 = vpop.f32.mrf.mxu0
  %v415 = vadd.f32 %v97, %v414
  %416 = vmatmul.bf16.gmra.mxu0 %v177
  %v417 = vpop.f32.mrf.mxu0
  %v418 = vadd.f32 %v97, %v417
  %v419 = vpop.f32.mrf.mxu0
  %v420 = vadd.f32 %v97, %v419
  %421 = vmatmul.bf16.gmra.mxu0 %v180
  %v422 = vpop.f32.mrf.mxu0
  %v423 = vadd.f32 %v97, %v422
  %v424 = vpop.f32.mrf.mxu0
  %v425 = vadd.f32 %v97, %v424
  %426 = vmatmul.bf16.gmra.mxu0 %v183
  %v427 = vpop.f32.mrf.mxu0
  %v428 = vadd.f32 %v97, %v427
  %v429 = vpop.f32.mrf.mxu0
  %v430 = vadd.f32 %v97, %v429
  %431 = vmatmul.bf16.gmra.mxu0 %v186
  %v432 = vpop.f32.mrf.mxu0
  %v433 = vadd.f32 %v97, %v432
  %v434 = vpop.f32.mrf.mxu0
  %v435 = vadd.f32 %v97, %v434
  %436 = vmatmul.bf16.gmra.mxu0 %v189
  %v437 = vpop.f32.mrf.mxu0
  %v438 = vadd.f32 %v97, %v437
  %v439 = vpop.f32.mrf.mxu0
  %440 = vdwg.mxu0
  %441 = vmatpush.bf16.msra.mxu0 %v338
  %442 = vmatpush.bf16.msra.mxu0 %v336
  %443 = vmatpush.bf16.msra.mxu0 %v334
  %444 = vmatpush.bf16.msra.mxu0 %v332
  %445 = vmatpush.bf16.msra.mxu0 %v330
  %446 = vmatpush.bf16.msra.mxu0 %v328
  %447 = vmatpush.bf16.msra.mxu0 %v326
  %448 = vmatpush.bf16.msra.mxu0 %v324
  %449 = vmatmul.bf16.gmra.mxu0 %v172
  %v450 = vpop.f32.mrf.mxu0
  %v451 = vadd.f32 %v408, %v450
  %v452 = vpop.f32.mrf.mxu0
  %v453 = vadd.f32 %v410, %v452
  %454 = vmatmul.bf16.gmra.mxu0 %v175
  %v455 = vpop.f32.mrf.mxu0
  %v456 = vadd.f32 %v413, %v455
  %v457 = vpop.f32.mrf.mxu0
  %v458 = vadd.f32 %v415, %v457
  %459 = vmatmul.bf16.gmra.mxu0 %v178
  %v460 = vpop.f32.mrf.mxu0
  %v461 = vadd.f32 %v418, %v460
  %v462 = vpop.f32.mrf.mxu0
  %v463 = vadd.f32 %v420, %v462
  %464 = vmatmul.bf16.gmra.mxu0 %v181
  %v465 = vpop.f32.mrf.mxu0
  %v466 = vadd.f32 %v423, %v465
  %v467 = vpop.f32.mrf.mxu0
  %v468 = vadd.f32 %v425, %v467
  %469 = vmatmul.bf16.gmra.mxu0 %v184
  %v470 = vpop.f32.mrf.mxu0
  %v471 = vadd.f32 %v428, %v470
  %v472 = vpop.f32.mrf.mxu0
  %v473 = vadd.f32 %v430, %v472
  %474 = vmatmul.bf16.gmra.mxu0 %v187
  %v475 = vpop.f32.mrf.mxu0
  %v476 = vadd.f32 %v433, %v475
  %v477 = vpop.f32.mrf.mxu0
  %v478 = vadd.f32 %v435, %v477
  %479 = vmatmul.bf16.gmra.mxu0 %v190
  %v480 = vpop.f32.mrf.mxu0
  %v481 = vadd.f32 %v438, %v480
  %v482 = vpop.f32.mrf.mxu0
  %483 = vdwg.mxu0
  %484 = vmatpush.bf16.msra.mxu0 0
  %485 = vmatpush.bf16.msra.mxu0 0
  %486 = vmatpush.bf16.msra.mxu0 0
  %487 = vmatpush.bf16.msra.mxu0 0
  %488 = vmatpush.bf16.msra.mxu0 0
  %489 = vmatpush.bf16.msra.mxu0 0
  %490 = vmatpush.bf16.msra.mxu0 0
  %491 = vmatpush.bf16.msra.mxu0 %v340
  %492 = vmatmul.bf16.gmra.mxu0 %v378
  %v493 = vpop.f32.mrf.mxu0
  %v494 = vadd.f32 %v451, %v493
  %v495 = vpop.f32.mrf.mxu0
  %v496 = vadd.f32 %v453, %v495
  %497 = vmatmul.bf16.gmra.mxu0 %v381
  %v498 = vpop.f32.mrf.mxu0
  %v499 = vadd.f32 %v456, %v498
  %v500 = vpop.f32.mrf.mxu0
  %v501 = vadd.f32 %v458, %v500
  %502 = vmatmul.bf16.gmra.mxu0 %v384
  %v503 = vpop.f32.mrf.mxu0
  %v504 = vadd.f32 %v461, %v503
  %v505 = vpop.f32.mrf.mxu0
  %v506 = vadd.f32 %v463, %v505
  %507 = vmatmul.bf16.gmra.mxu0 %v387
  %v508 = vpop.f32.mrf.mxu0
  %v509 = vadd.f32 %v466, %v508
  %v510 = vpop.f32.mrf.mxu0
  %v511 = vadd.f32 %v468, %v510
  %512 = vmatmul.bf16.gmra.mxu0 %v390
  %v513 = vpop.f32.mrf.mxu0
  %v514 = vadd.f32 %v471, %v513
  %v515 = vpop.f32.mrf.mxu0
  %v516 = vadd.f32 %v473, %v515
  %517 = vmatmul.bf16.gmra.mxu0 %v393
  %v518 = vpop.f32.mrf.mxu0
  %v519 = vadd.f32 %v476, %v518
  %v520 = vpop.f32.mrf.mxu0
  %v521 = vadd.f32 %v478, %v520
  %522 = vmatmul.bf16.gmra.mxu0 %v396
  %v523 = vpop.f32.mrf.mxu0
  %v524 = vadd.f32 %v481, %v523
  %v525 = vpop.f32.mrf.mxu0
  %526 = vdwg.mxu0
  %527 = vmatpush.bf16.msra.mxu0 %v323
  %528 = vmatpush.bf16.msra.mxu0 %v321
  %529 = vmatpush.bf16.msra.mxu0 %v319
  %530 = vmatpush.bf16.msra.mxu0 %v317
  %531 = vmatpush.bf16.msra.mxu0 %v315
  %532 = vmatpush.bf16.msra.mxu0 %v313
  %533 = vmatpush.bf16.msra.mxu0 %v311
  %534 = vmatpush.bf16.msra.mxu0 %v309
  %535 = vmatmul.bf16.gmra.mxu0 %v171
  %v536 = vpop.f32.mrf.mxu0
  %v537 = vadd.f32 %v98, %v536
  %v538 = vpop.f32.mrf.mxu0
  %v539 = vadd.f32 %v98, %v538
  %540 = vmatmul.bf16.gmra.mxu0 %v174
  %v541 = vpop.f32.mrf.mxu0
  %v542 = vadd.f32 %v98, %v541
  %v543 = vpop.f32.mrf.mxu0
  %v544 = vadd.f32 %v98, %v543
  %545 = vmatmul.bf16.gmra.mxu0 %v177
  %v546 = vpop.f32.mrf.mxu0
  %v547 = vadd.f32 %v98, %v546
  %v548 = vpop.f32.mrf.mxu0
  %v549 = vadd.f32 %v98, %v548
  %550 = vmatmul.bf16.gmra.mxu0 %v180
  %v551 = vpop.f32.mrf.mxu0
  %v552 = vadd.f32 %v98, %v551
  %v553 = vpop.f32.mrf.mxu0
  %v554 = vadd.f32 %v98, %v553
  %555 = vmatmul.bf16.gmra.mxu0 %v183
  %v556 = vpop.f32.mrf.mxu0
  %v557 = vadd.f32 %v98, %v556
  %v558 = vpop.f32.mrf.mxu0
  %v559 = vadd.f32 %v98, %v558
  %560 = vmatmul.bf16.gmra.mxu0 %v186
  %v561 = vpop.f32.mrf.mxu0
  %v562 = vadd.f32 %v98, %v561
  %v563 = vpop.f32.mrf.mxu0
  %v564 = vadd.f32 %v98, %v563
  %565 = vmatmul.bf16.gmra.mxu0 %v189
  %v566 = vpop.f32.mrf.mxu0
  %v567 = vadd.f32 %v98, %v566
  %v568 = vpop.f32.mrf.mxu0
  %569 = vdwg.mxu0
  %570 = vmatpush.bf16.msra.mxu0 %v339
  %571 = vmatpush.bf16.msra.mxu0 %v337
  %572 = vmatpush.bf16.msra.mxu0 %v335
  %573 = vmatpush.bf16.msra.mxu0 %v333
  %574 = vmatpush.bf16.msra.mxu0 %v331
  %575 = vmatpush.bf16.msra.mxu0 %v329
  %576 = vmatpush.bf16.msra.mxu0 %v327
  %577 = vmatpush.bf16.msra.mxu0 %v325
  %578 = vmatmul.bf16.gmra.mxu0 %v172
  %v579 = vpop.f32.mrf.mxu0
  %v580 = vadd.f32 %v537, %v579
  %v581 = vpop.f32.mrf.mxu0
  %v582 = vadd.f32 %v539, %v581
  %583 = vmatmul.bf16.gmra.mxu0 %v175
  %v584 = vpop.f32.mrf.mxu0
  %v585 = vadd.f32 %v542, %v584
  %v586 = vpop.f32.mrf.mxu0
  %v587 = vadd.f32 %v544, %v586
  %588 = vmatmul.bf16.gmra.mxu0 %v178
  %v589 = vpop.f32.mrf.mxu0
  %v590 = vadd.f32 %v547, %v589
  %v591 = vpop.f32.mrf.mxu0
  %v592 = vadd.f32 %v549, %v591
  %593 = vmatmul.bf16.gmra.mxu0 %v181
  %v594 = vpop.f32.mrf.mxu0
  %v595 = vadd.f32 %v552, %v594
  %v596 = vpop.f32.mrf.mxu0
  %v597 = vadd.f32 %v554, %v596
  %598 = vmatmul.bf16.gmra.mxu0 %v184
  %v599 = vpop.f32.mrf.mxu0
  %v600 = vadd.f32 %v557, %v599
  %v601 = vpop.f32.mrf.mxu0
  %v602 = vadd.f32 %v559, %v601
  %603 = vmatmul.bf16.gmra.mxu0 %v187
  %v604 = vpop.f32.mrf.mxu0
  %v605 = vadd.f32 %v562, %v604
  %v606 = vpop.f32.mrf.mxu0
  %v607 = vadd.f32 %v564, %v606
  %608 = vmatmul.bf16.gmra.mxu0 %v190
  %v609 = vpop.f32.mrf.mxu0
  %v610 = vadd.f32 %v567, %v609
  %v611 = vpop.f32.mrf.mxu0
  %612 = vdwg.mxu0
  %613 = vmatpush.bf16.msra.mxu0 0
  %614 = vmatpush.bf16.msra.mxu0 0
  %615 = vmatpush.bf16.msra.mxu0 0
  %616 = vmatpush.bf16.msra.mxu0 0
  %617 = vmatpush.bf16.msra.mxu0 0
  %618 = vmatpush.bf16.msra.mxu0 0
  %619 = vmatpush.bf16.msra.mxu0 0
  %620 = vmatpush.bf16.msra.mxu0 %v341
  %621 = vmatmul.bf16.gmra.mxu0 %v378
  %v622 = vpop.f32.mrf.mxu0
  %v623 = vadd.f32 %v580, %v622
  %v624 = vpop.f32.mrf.mxu0
  %v625 = vadd.f32 %v582, %v624
  %626 = vmatmul.bf16.gmra.mxu0 %v381
  %v627 = vpop.f32.mrf.mxu0
  %v628 = vadd.f32 %v585, %v627
  %v629 = vpop.f32.mrf.mxu0
  %v630 = vadd.f32 %v587, %v629
  %631 = vmatmul.bf16.gmra.mxu0 %v384
  %v632 = vpop.f32.mrf.mxu0
  %v633 = vadd.f32 %v590, %v632
  %v634 = vpop.f32.mrf.mxu0
  %v635 = vadd.f32 %v592, %v634
  %636 = vmatmul.bf16.gmra.mxu0 %v387
  %v637 = vpop.f32.mrf.mxu0
  %v638 = vadd.f32 %v595, %v637
  %v639 = vpop.f32.mrf.mxu0
  %v640 = vadd.f32 %v597, %v639
  %641 = vmatmul.bf16.gmra.mxu0 %v390
  %v642 = vpop.f32.mrf.mxu0
  %v643 = vadd.f32 %v600, %v642
  %v644 = vpop.f32.mrf.mxu0
  %v645 = vadd.f32 %v602, %v644
  %646 = vmatmul.bf16.gmra.mxu0 %v393
  %v647 = vpop.f32.mrf.mxu0
  %v648 = vadd.f32 %v605, %v647
  %v649 = vpop.f32.mrf.mxu0
  %v650 = vadd.f32 %v607, %v649
  %651 = vmatmul.bf16.gmra.mxu0 %v396
  %v652 = vpop.f32.mrf.mxu0
  %v653 = vadd.f32 %v610, %v652
  %v654 = vpop.f32.mrf.mxu0
  %655 = vdwg.mxu0
  %v656 = vmax.f32 %v494, 0.0
  %v657 = vmax.f32 %v623, 0.0
  %v658 = vmax.f32 %v496, 0.0
  %v659 = vmax.f32 %v625, 0.0
  %v660 = vmax.f32 %v499, 0.0
  %v661 = vmax.f32 %v628, 0.0
  %v662 = vmax.f32 %v501, 0.0
  %v663 = vmax.f32 %v630, 0.0
  %v664 = vmax.f32 %v504, 0.0
  %v665 = vmax.f32 %v633, 0.0
  %v666 = vmax.f32 %v506, 0.0
  %v667 = vmax.f32 %v635, 0.0
  %v668 = vmax.f32 %v509, 0.0
  %v669 = vmax.f32 %v638, 0.0
  %v670 = vmax.f32 %v511, 0.0
  %v671 = vmax.f32 %v640, 0.0
  %v672 = vmax.f32 %v514, 0.0
  %v673 = vmax.f32 %v643, 0.0
  %v674 = vmax.f32 %v516, 0.0
  %v675 = vmax.f32 %v645, 0.0
  %v676 = vmax.f32 %v519, 0.0
  %v677 = vmax.f32 %v648, 0.0
  %v678 = vmax.f32 %v521, 0.0
  %v679 = vmax.f32 %v650, 0.0
  %v680 = vmax.f32 %v524, 0.0
  %v681 = vmax.f32 %v653, 0.0
  %708 = vrot.lane.b32.xlu0 %v656, 112
  %v709 = vpop.permute.xlu0 %708
  %710 = vrot.lane.b32.xlu0 %v657, 112
  %v711 = vpop.permute.xlu0 %710
  %712 = vrot.lane.b32.xlu0 %v658, 112
  %v713 = vpop.permute.xlu0 %712
  %714 = vrot.lane.b32.xlu0 %v659, 112
  %v715 = vpop.permute.xlu0 %714
  %716 = vrot.lane.b32.xlu0 %v660, 112
  %v717 = vpop.permute.xlu0 %716
  %718 = vrot.lane.b32.xlu0 %v661, 112
  %v719 = vpop.permute.xlu0 %718
  %720 = vrot.lane.b32.xlu0 %v662, 112
  %v721 = vpop.permute.xlu0 %720
  %722 = vrot.lane.b32.xlu0 %v663, 112
  %v723 = vpop.permute.xlu0 %722
  %724 = vrot.lane.b32.xlu0 %v664, 112
  %v725 = vpop.permute.xlu0 %724
  %726 = vrot.lane.b32.xlu0 %v665, 112
  %v727 = vpop.permute.xlu0 %726
  %728 = vrot.lane.b32.xlu0 %v666, 112
  %v729 = vpop.permute.xlu0 %728
  %730 = vrot.lane.b32.xlu0 %v667, 112
  %v731 = vpop.permute.xlu0 %730
  %732 = vrot.lane.b32.xlu0 %v668, 112
  %v733 = vpop.permute.xlu0 %732
  %734 = vrot.lane.b32.xlu0 %v669, 112
  %v735 = vpop.permute.xlu0 %734
  %736 = vrot.lane.b32.xlu0 %v670, 112
  %v737 = vpop.permute.xlu0 %736
  %738 = vrot.lane.b32.xlu0 %v671, 112
  %v739 = vpop.permute.xlu0 %738
  %740 = vrot.lane.b32.xlu0 %v672, 112
  %v741 = vpop.permute.xlu0 %740
  %742 = vrot.lane.b32.xlu0 %v673, 112
  %v743 = vpop.permute.xlu0 %742
  %744 = vrot.lane.b32.xlu0 %v674, 112
  %v745 = vpop.permute.xlu0 %744
  %746 = vrot.lane.b32.xlu0 %v675, 112
  %v747 = vpop.permute.xlu0 %746
  %748 = vrot.lane.b32.xlu0 %v676, 112
  %v749 = vpop.permute.xlu0 %748
  %750 = vrot.lane.b32.xlu0 %v677, 112
  %v751 = vpop.permute.xlu0 %750
  %752 = vrot.lane.b32.xlu0 %v678, 112
  %v753 = vpop.permute.xlu0 %752
  %754 = vrot.lane.b32.xlu0 %v679, 112
  %v755 = vpop.permute.xlu0 %754
  %756 = vrot.lane.b32.xlu0 %v680, 112
  %v757 = vpop.permute.xlu0 %756
  %758 = vrot.lane.b32.xlu0 %v681, 112
  %v759 = vpop.permute.xlu0 %758
  %vm760 = vcmask 916480
  %v761 = vsel %vm760, %v709, %v711
  %v762 = vsel %vm760, %v713, %v715
  %v763 = vsel %vm760, %v717, %v719
  %v764 = vsel %vm760, %v721, %v723
  %v765 = vsel %vm760, %v725, %v727
  %v766 = vsel %vm760, %v729, %v731
  %v767 = vsel %vm760, %v733, %v735
  %v768 = vsel %vm760, %v737, %v739
  %v769 = vsel %vm760, %v741, %v743
  %v770 = vsel %vm760, %v745, %v747
  %v771 = vsel %vm760, %v749, %v751
  %v772 = vsel %vm760, %v753, %v755
  %v773 = vsel %vm760, %v757, %v759
  %v813 = vsel %vm760, %v711, %v709
  %v814 = vsel %vm760, %v715, %v713
  %v815 = vsel %vm760, %v719, %v717
  %v816 = vsel %vm760, %v723, %v721
  %v817 = vsel %vm760, %v727, %v725
  %v818 = vsel %vm760, %v731, %v729
  %v819 = vsel %vm760, %v735, %v733
  %v820 = vsel %vm760, %v739, %v737
  %v821 = vsel %vm760, %v743, %v741
  %v822 = vsel %vm760, %v747, %v745
  %v823 = vsel %vm760, %v751, %v749
  %v824 = vsel %vm760, %v755, %v753
  %v825 = vsel %vm760, %v759, %v757
  %v826 = vmax.f32 %v656, %v761
  %v827 = vmax.f32 %v657, %v813
  %v828 = vmax.f32 %v658, %v762
  %v829 = vmax.f32 %v659, %v814
  %v830 = vmax.f32 %v660, %v763
  %v831 = vmax.f32 %v661, %v815
  %v832 = vmax.f32 %v662, %v764
  %v833 = vmax.f32 %v663, %v816
  %v834 = vmax.f32 %v664, %v765
  %v835 = vmax.f32 %v665, %v817
  %v836 = vmax.f32 %v666, %v766
  %v837 = vmax.f32 %v667, %v818
  %v838 = vmax.f32 %v668, %v767
  %v839 = vmax.f32 %v669, %v819
  %v840 = vmax.f32 %v670, %v768
  %v841 = vmax.f32 %v671, %v820
  %v842 = vmax.f32 %v672, %v769
  %v843 = vmax.f32 %v673, %v821
  %v844 = vmax.f32 %v674, %v770
  %v845 = vmax.f32 %v675, %v822
  %v846 = vmax.f32 %v676, %v771
  %v847 = vmax.f32 %v677, %v823
  %v848 = vmax.f32 %v678, %v772
  %v849 = vmax.f32 %v679, %v824
  %v850 = vmax.f32 %v680, %v773
  %v851 = vmax.f32 %v681, %v825
  %v852 = vmax.f32 %v826, %v840
  %v853 = vmax.f32 %v827, %v841
  %v854 = vmax.f32 %v828, %v842
  %v855 = vmax.f32 %v829, %v843
  %v856 = vmax.f32 %v830, %v844
  %v857 = vmax.f32 %v831, %v845
  %v858 = vmax.f32 %v832, %v846
  %v859 = vmax.f32 %v833, %v847
  %v860 = vmax.f32 %v834, %v848
  %v861 = vmax.f32 %v835, %v849
  %v862 = vpack.c.bf16 %v853, %v852
  %v863 = vpack.c.bf16 %v855, %v854
  %v864 = vpack.c.bf16 %v857, %v856
  %v865 = vpack.c.bf16 %v859, %v858
  %v866 = vpack.c.bf16 %v861, %v860
  %v867 = vmax.f32 %v840, %v828
  %v868 = vmax.f32 %v841, %v829
  %v869 = vmax.f32 %v842, %v830
  %v870 = vmax.f32 %v843, %v831
  %v871 = vmax.f32 %v844, %v832
  %v872 = vmax.f32 %v845, %v833
  %v873 = vmax.f32 %v846, %v834
  %v874 = vmax.f32 %v847, %v835
  %v875 = vmax.f32 %v848, %v836
  %v876 = vmax.f32 %v849, %v837
  %v877 = vpack.c.bf16 %v868, %v867
  %v878 = vpack.c.bf16 %v870, %v869
  %v879 = vpack.c.bf16 %v872, %v871
  %v880 = vpack.c.bf16 %v874, %v873
  %v881 = vpack.c.bf16 %v876, %v875
  %v882 = vmax.f32 %v836, %v850
  %v883 = vmax.f32 %v837, %v851
  %v884 = vpack.c.bf16 %v883, %v882
  %v885 = vmax.f32 %v850, %v838
  %v886 = vmax.f32 %v851, %v839
  %v887 = vpack.c.bf16 %v886, %v885
  %v893 = vunpack.c.l.b16 %v862
  %v894 = vunpack.c.h.b16 %v862
  %v895 = vunpack.c.l.b16 %v863
  %v896 = vunpack.c.h.b16 %v863
  %v897 = vunpack.c.l.b16 %v864
  %v898 = vunpack.c.h.b16 %v864
  %v899 = vunpack.c.l.b16 %v865
  %v900 = vunpack.c.h.b16 %v865
  %v901 = vunpack.c.l.b16 %v866
  %v902 = vunpack.c.h.b16 %v866
  %v903 = vpack.c.b16 %v895, %v893
  %v904 = vpack.c.b16 %v896, %v894
  %v905 = vpack.c.b16 %v899, %v897
  %v906 = vpack.c.b16 %v900, %v898
  %v907 = vpack.c.b16 %v901, %v901
  %v908 = vpack.c.b16 %v902, %v902
  %v920 = vunpack.c.l.b16 %v877
  %v921 = vunpack.c.h.b16 %v877
  %v922 = vunpack.c.l.b16 %v878
  %v923 = vunpack.c.h.b16 %v878
  %v924 = vunpack.c.l.b16 %v879
  %v925 = vunpack.c.h.b16 %v879
  %v926 = vunpack.c.l.b16 %v880
  %v927 = vunpack.c.h.b16 %v880
  %v928 = vunpack.c.l.b16 %v881
  %v929 = vunpack.c.h.b16 %v881
  %v930 = vpack.c.b16 %v922, %v920
  %v931 = vpack.c.b16 %v923, %v921
  %v932 = vpack.c.b16 %v926, %v924
  %v933 = vpack.c.b16 %v927, %v925
  %v934 = vpack.c.b16 %v928, %v928
  %v935 = vpack.c.b16 %v929, %v929
  %v943 = vunpack.c.l.b16 %v884
  %v944 = vunpack.c.h.b16 %v884
  %v945 = vpack.c.b16 %v897, %v895
  %v946 = vpack.c.b16 %v898, %v896
  %v947 = vpack.c.b16 %v901, %v899
  %v948 = vpack.c.b16 %v902, %v900
  %v949 = vpack.c.b16 %v943, %v943
  %v950 = vpack.c.b16 %v944, %v944
  %v958 = vunpack.c.l.b16 %v887
  %v959 = vunpack.c.h.b16 %v887
  %v960 = vpack.c.b16 %v924, %v922
  %v961 = vpack.c.b16 %v925, %v923
  %v962 = vpack.c.b16 %v928, %v926
  %v963 = vpack.c.b16 %v929, %v927
  %v964 = vpack.c.b16 %v958, %v958
  %v965 = vpack.c.b16 %v959, %v959
  %v972 = vld [vmem:[%s3] sm:$0xff]
  %v973 = vld [vmem:[%s3 + $0x8] sm:$0xff]
  %v974 = vld [vmem:[%s3 + $0x10] sm:$0xff]
  %v975 = vld [vmem:[%s3 + $0x18] sm:$0xff]
  %v976 = vld [vmem:[%s3 + $0x20] sm:$0xff]
  %v977 = vld [vmem:[%s3 + $0x28] sm:$0xff]
  %v978 = vld [vmem:[%s3 + $0x30] sm:$0xff]
  %v979 = vld [vmem:[%s3 + $0x38] sm:$0xff]
  %v980 = vld [vmem:[%s3 + $0x40] sm:$0xff]
  %v981 = vld [vmem:[%s3 + $0x48] sm:$0xff]
  %v982 = vld [vmem:[%s3 + $0x50] sm:$0xff]
  %v983 = vld [vmem:[%s3 + $0x58] sm:$0xff]
  %v984 = vld [vmem:[%s3 + $0x60] sm:$0xff]
  %v985 = vld [vmem:[%s3 + $0x68] sm:$0xff]
  %v986 = vld [vmem:[%s3 + $0x70] sm:$0xff]
  %v987 = vld [vmem:[%s3 + $0x78] sm:$0xff]
  %v988 = vld [vmem:[%s3 + $0x80] sm:$0xff]
  %v989 = vld [vmem:[%s3 + $0x88] sm:$0xff]
  %v990 = vld [vmem:[%s3 + $0x90] sm:$0xff]
  %v991 = vld [vmem:[%s3 + $0x98] sm:$0xff]
  %v992 = vld [vmem:[%s3 + $0xa0] sm:$0xff]
  %v993 = vld [vmem:[%s3 + $0xa8] sm:$0xff]
  %v994 = vld [vmem:[%s3 + $0xb0] sm:$0xff]
  %v995 = vld [vmem:[%s3 + $0xb8] sm:$0xff]
  %v996 = vld [vmem:[%s3 + $0xc0] sm:$0xff]
  %v997 = vld [vmem:[%s3 + $0xc8] sm:$0xff]
  %v998 = vld [vmem:[%s3 + $0xd0] sm:$0xff]
  %v999 = vld [vmem:[%s3 + $0xd8] sm:$0xff]
  %v1000 = vld [vmem:[%s3 + $0xe0] sm:$0xff]
  %v1001 = vld [vmem:[%s3 + $0xe8] sm:$0xff]
  %v1002 = vld [vmem:[%s3 + $0xf0] sm:$0xff]
  %v1003 = vld [vmem:[%s3 + $0xf8] sm:$0xff]
  %v1004 = vld [vmem:[%s3 + $0x100] sm:$0xff]
  %v1005 = vld [vmem:[%s3 + $0x108] sm:$0xff]
  %v1006 = vld [vmem:[%s3 + $0x110] sm:$0xff]
  %v1007 = vld [vmem:[%s3 + $0x118] sm:$0xff]
  %v1008 = vld [vmem:[%s3 + $0x120] sm:$0xff]
  %v1009 = vld [vmem:[%s3 + $0x128] sm:$0xff]
  %v1010 = vld [vmem:[%s3 + $0x130] sm:$0xff]
  %v1011 = vld [vmem:[%s3 + $0x138] sm:$0xff]
  %v1012 = vld [vmem:[%s3 + $0x140] sm:$0xff]
  %v1013 = vld [vmem:[%s3 + $0x148] sm:$0xff]
  %v1014 = vld [vmem:[%s3 + $0x150] sm:$0xff]
  %v1015 = vld [vmem:[%s3 + $0x158] sm:$0xff]
  %v1016 = vld [vmem:[%s3 + $0x160] sm:$0xff]
  %v1017 = vld [vmem:[%s3 + $0x168] sm:$0xff]
  %v1018 = vld [vmem:[%s3 + $0x170] sm:$0xff]
  %v1019 = vld [vmem:[%s3 + $0x178] sm:$0xff]
  %v1020 = vld [vmem:[%s3 + $0x180] sm:$0xff]
  %v1021 = vld [vmem:[%s3 + $0x188] sm:$0xff]
  %v1022 = vld [vmem:[%s3 + $0x190] sm:$0xff]
  %v1023 = vld [vmem:[%s3 + $0x198] sm:$0xff]
  %v1024 = vld [vmem:[%s3 + $0x1a0] sm:$0xff]
  %v1025 = vld [vmem:[%s3 + $0x1a8] sm:$0xff]
  %v1026 = vld [vmem:[%s3 + $0x1b0] sm:$0xff]
  %v1027 = vld [vmem:[%s3 + $0x1b8] sm:$0xff]
  %v1028 = vld [vmem:[%s3 + $0x1c0] sm:$0xff]
  %v1029 = vld [vmem:[%s3 + $0x1c8] sm:$0xff]
  %v1030 = vld [vmem:[%s3 + $0x1d0] sm:$0xff]
  %v1031 = vld [vmem:[%s3 + $0x1d8] sm:$0xff]
  %v1032 = vld [vmem:[%s3 + $0x1e0] sm:$0xff]
  %v1033 = vld [vmem:[%s3 + $0x1e8] sm:$0xff]
  %v1034 = vld [vmem:[%s3 + $0x1f0] sm:$0xff]
  %v1035 = vld [vmem:[%s3 + $0x1f8] sm:$0xff]
  %v1036 = vld [vmem:[%s3 + $0x200] sm:$0xff]
  %v1037 = vld [vmem:[%s3 + $0x208] sm:$0xff]
  %v1038 = vld [vmem:[%s3 + $0x210] sm:$0xff]
  %v1039 = vld [vmem:[%s3 + $0x218] sm:$0xff]
  %v1040 = vld [vmem:[%s3 + $0x220] sm:$0xff]
  %v1041 = vld [vmem:[%s3 + $0x228] sm:$0xff]
  %v1042 = vld [vmem:[%s3 + $0x230] sm:$0xff]
  %v1043 = vld [vmem:[%s3 + $0x238] sm:$0xff]
  %v1044 = vld [vmem:[%s3 + $0x240] sm:$0xff]
  %v1045 = vld [vmem:[%s3 + $0x248] sm:$0xff]
  %v1046 = vld [vmem:[%s3 + $0x250] sm:$0xff]
  %v1047 = vld [vmem:[%s3 + $0x258] sm:$0xff]
  %v1048 = vld [vmem:[%s3 + $0x260] sm:$0xff]
  %v1049 = vld [vmem:[%s3 + $0x268] sm:$0xff]
  %v1050 = vld [vmem:[%s3 + $0x270] sm:$0xff]
  %v1051 = vld [vmem:[%s3 + $0x278] sm:$0xff]
  %v1052 = vld [vmem:[%s3 + $0x280] sm:$0xff]
  %v1053 = vld [vmem:[%s3 + $0x288] sm:$0xff]
  %v1054 = vld [vmem:[%s3 + $0x290] sm:$0xff]
  %v1055 = vld [vmem:[%s3 + $0x298] sm:$0xff]
  %v1056 = vld [vmem:[%s3 + $0x2a0] sm:$0xff]
  %v1057 = vld [vmem:[%s3 + $0x2a8] sm:$0xff]
  %v1058 = vld [vmem:[%s3 + $0x2b0] sm:$0xff]
  %v1059 = vld [vmem:[%s3 + $0x2b8] sm:$0xff]
  %v1060 = vld [vmem:[%s3 + $0x2c0] sm:$0xff]
  %v1061 = vld [vmem:[%s3 + $0x2c8] sm:$0xff]
  %v1062 = vld [vmem:[%s3 + $0x2d0] sm:$0xff]
  %v1063 = vld [vmem:[%s3 + $0x2d8] sm:$0xff]
  %v1064 = vld [vmem:[%s3 + $0x2e0] sm:$0xff]
  %v1065 = vld [vmem:[%s3 + $0x2e8] sm:$0xff]
  %v1066 = vld [vmem:[%s3 + $0x2f0] sm:$0xff]
  %v1067 = vld [vmem:[%s3 + $0x2f8] sm:$0xff]
  %v1068 = vld [vmem:[%s3 + $0x300] sm:$0xff]
  %v1069 = vld [vmem:[%s3 + $0x308] sm:$0xff]
  %v1070 = vld [vmem:[%s3 + $0x310] sm:$0xff]
  %v1071 = vld [vmem:[%s3 + $0x318] sm:$0xff]
  %v1072 = vld [vmem:[%s3 + $0x320] sm:$0xff]
  %v1073 = vld [vmem:[%s3 + $0x328] sm:$0xff]
  %v1074 = vld [vmem:[%s3 + $0x330] sm:$0xff]
  %v1075 = vld [vmem:[%s3 + $0x338] sm:$0xff]
  %v1076 = vld [vmem:[%s3 + $0x340] sm:$0xff]
  %v1077 = vld [vmem:[%s3 + $0x348] sm:$0xff]
  %v1078 = vld [vmem:[%s3 + $0x350] sm:$0xff]
  %v1079 = vld [vmem:[%s3 + $0x358] sm:$0xff]
  %v1080 = vld [vmem:[%s3 + $0x360] sm:$0xff]
  %v1081 = vld [vmem:[%s3 + $0x368] sm:$0xff]
  %v1082 = vld [vmem:[%s3 + $0x370] sm:$0xff]
  %v1083 = vld [vmem:[%s3 + $0x378] sm:$0xff]
  %v1084 = vld [vmem:[%s3 + $0x380] sm:$0xff]
  %v1085 = vld [vmem:[%s3 + $0x388] sm:$0xff]
  %v1086 = vld [vmem:[%s3 + $0x390] sm:$0xff]
  %v1087 = vld [vmem:[%s3 + $0x398] sm:$0xff]
  %v1088 = vld [vmem:[%s3 + $0x3a0] sm:$0xff]
  %v1089 = vld [vmem:[%s3 + $0x3a8] sm:$0xff]
  %v1090 = vld [vmem:[%s3 + $0x3b0] sm:$0xff]
  %v1091 = vld [vmem:[%s3 + $0x3b8] sm:$0xff]
  %v1092 = vld [vmem:[%s3 + $0x3c0] sm:$0xff]
  %v1093 = vld [vmem:[%s3 + $0x3c8] sm:$0xff]
  %v1094 = vld [vmem:[%s3 + $0x3d0] sm:$0xff]
  %v1095 = vld [vmem:[%s3 + $0x3d8] sm:$0xff]
  %v1096 = vld [vmem:[%s3 + $0x3e0] sm:$0xff]
  %v1097 = vld [vmem:[%s3 + $0x3e8] sm:$0xff]
  %v1098 = vld [vmem:[%s3 + $0x3f0] sm:$0xff]
  %v1099 = vld [vmem:[%s3 + $0x3f8] sm:$0xff]
  %v1100 = vld [vmem:[%s4] sm:$0x3]
  %v1102 = vperm.slane %v1100, 0
  %v1103 = vperm.slane %v1100, 1
  %v1234 = vunpack.c.l.b16 %v972
  %v1235 = vunpack.c.h.b16 %v972
  %v1236 = vunpack.c.l.b16 %v973
  %v1237 = vunpack.c.h.b16 %v973
  %v1238 = vunpack.c.l.b16 %v974
  %v1239 = vunpack.c.h.b16 %v974
  %v1240 = vunpack.c.l.b16 %v975
  %v1241 = vunpack.c.h.b16 %v975
  %v1242 = vunpack.c.l.b16 %v976
  %v1243 = vunpack.c.h.b16 %v976
  %v1244 = vunpack.c.l.b16 %v977
  %v1245 = vunpack.c.h.b16 %v977
  %v1246 = vunpack.c.l.b16 %v978
  %v1247 = vunpack.c.h.b16 %v978
  %v1248 = vunpack.c.l.b16 %v979
  %v1249 = vunpack.c.h.b16 %v979
  %v1250 = vunpack.c.l.b16 %v980
  %v1251 = vunpack.c.h.b16 %v980
  %v1252 = vunpack.c.l.b16 %v981
  %v1253 = vunpack.c.h.b16 %v981
  %v1254 = vunpack.c.l.b16 %v982
  %v1255 = vunpack.c.h.b16 %v982
  %v1256 = vunpack.c.l.b16 %v983
  %v1257 = vunpack.c.h.b16 %v983
  %v1258 = vunpack.c.l.b16 %v984
  %v1259 = vunpack.c.h.b16 %v984
  %v1260 = vunpack.c.l.b16 %v985
  %v1261 = vunpack.c.h.b16 %v985
  %v1262 = vunpack.c.l.b16 %v986
  %v1263 = vunpack.c.h.b16 %v986
  %v1264 = vunpack.c.l.b16 %v987
  %v1265 = vunpack.c.h.b16 %v987
  %v1266 = vunpack.c.l.b16 %v988
  %v1267 = vunpack.c.h.b16 %v988
  %v1268 = vunpack.c.l.b16 %v989
  %v1269 = vunpack.c.h.b16 %v989
  %v1270 = vunpack.c.l.b16 %v990
  %v1271 = vunpack.c.h.b16 %v990
  %v1272 = vunpack.c.l.b16 %v991
  %v1273 = vunpack.c.h.b16 %v991
  %v1274 = vunpack.c.l.b16 %v992
  %v1275 = vunpack.c.h.b16 %v992
  %v1276 = vunpack.c.l.b16 %v993
  %v1277 = vunpack.c.h.b16 %v993
  %v1278 = vunpack.c.l.b16 %v994
  %v1279 = vunpack.c.h.b16 %v994
  %v1280 = vunpack.c.l.b16 %v995
  %v1281 = vunpack.c.h.b16 %v995
  %v1282 = vunpack.c.l.b16 %v996
  %v1283 = vunpack.c.h.b16 %v996
  %v1284 = vunpack.c.l.b16 %v997
  %v1285 = vunpack.c.h.b16 %v997
  %v1286 = vunpack.c.l.b16 %v998
  %v1287 = vunpack.c.h.b16 %v998
  %v1288 = vunpack.c.l.b16 %v999
  %v1289 = vunpack.c.h.b16 %v999
  %v1290 = vunpack.c.l.b16 %v1000
  %v1291 = vunpack.c.h.b16 %v1000
  %v1292 = vunpack.c.l.b16 %v1001
  %v1293 = vunpack.c.h.b16 %v1001
  %v1294 = vunpack.c.l.b16 %v1002
  %v1295 = vunpack.c.h.b16 %v1002
  %v1296 = vunpack.c.l.b16 %v1003
  %v1297 = vunpack.c.h.b16 %v1003
  %v1298 = vunpack.c.l.b16 %v1004
  %v1299 = vunpack.c.h.b16 %v1004
  %v1300 = vunpack.c.l.b16 %v1005
  %v1301 = vunpack.c.h.b16 %v1005
  %v1302 = vunpack.c.l.b16 %v1006
  %v1303 = vunpack.c.h.b16 %v1006
  %v1304 = vunpack.c.l.b16 %v1007
  %v1305 = vunpack.c.h.b16 %v1007
  %v1306 = vunpack.c.l.b16 %v1008
  %v1307 = vunpack.c.h.b16 %v1008
  %v1308 = vunpack.c.l.b16 %v1009
  %v1309 = vunpack.c.h.b16 %v1009
  %v1310 = vunpack.c.l.b16 %v1010
  %v1311 = vunpack.c.h.b16 %v1010
  %v1312 = vunpack.c.l.b16 %v1011
  %v1313 = vunpack.c.h.b16 %v1011
  %v1314 = vunpack.c.l.b16 %v1012
  %v1315 = vunpack.c.h.b16 %v1012
  %v1316 = vunpack.c.l.b16 %v1013
  %v1317 = vunpack.c.h.b16 %v1013
  %v1318 = vunpack.c.l.b16 %v1014
  %v1319 = vunpack.c.h.b16 %v1014
  %v1320 = vunpack.c.l.b16 %v1015
  %v1321 = vunpack.c.h.b16 %v1015
  %v1322 = vunpack.c.l.b16 %v1016
  %v1323 = vunpack.c.h.b16 %v1016
  %v1324 = vunpack.c.l.b16 %v1017
  %v1325 = vunpack.c.h.b16 %v1017
  %v1326 = vunpack.c.l.b16 %v1018
  %v1327 = vunpack.c.h.b16 %v1018
  %v1328 = vunpack.c.l.b16 %v1019
  %v1329 = vunpack.c.h.b16 %v1019
  %v1330 = vunpack.c.l.b16 %v1020
  %v1331 = vunpack.c.h.b16 %v1020
  %v1332 = vunpack.c.l.b16 %v1021
  %v1333 = vunpack.c.h.b16 %v1021
  %v1334 = vunpack.c.l.b16 %v1022
  %v1335 = vunpack.c.h.b16 %v1022
  %v1336 = vunpack.c.l.b16 %v1023
  %v1337 = vunpack.c.h.b16 %v1023
  %v1338 = vunpack.c.l.b16 %v1024
  %v1339 = vunpack.c.h.b16 %v1024
  %v1340 = vunpack.c.l.b16 %v1025
  %v1341 = vunpack.c.h.b16 %v1025
  %v1342 = vunpack.c.l.b16 %v1026
  %v1343 = vunpack.c.h.b16 %v1026
  %v1344 = vunpack.c.l.b16 %v1027
  %v1345 = vunpack.c.h.b16 %v1027
  %v1346 = vunpack.c.l.b16 %v1028
  %v1347 = vunpack.c.h.b16 %v1028
  %v1348 = vunpack.c.l.b16 %v1029
  %v1349 = vunpack.c.h.b16 %v1029
  %v1350 = vunpack.c.l.b16 %v1030
  %v1351 = vunpack.c.h.b16 %v1030
  %v1352 = vunpack.c.l.b16 %v1031
  %v1353 = vunpack.c.h.b16 %v1031
  %v1354 = vunpack.c.l.b16 %v1032
  %v1355 = vunpack.c.h.b16 %v1032
  %v1356 = vunpack.c.l.b16 %v1033
  %v1357 = vunpack.c.h.b16 %v1033
  %v1358 = vunpack.c.l.b16 %v1034
  %v1359 = vunpack.c.h.b16 %v1034
  %v1360 = vunpack.c.l.b16 %v1035
  %v1361 = vunpack.c.h.b16 %v1035
  %v1362 = vunpack.c.l.b16 %v1036
  %v1363 = vunpack.c.h.b16 %v1036
  %v1364 = vunpack.c.l.b16 %v1037
  %v1365 = vunpack.c.h.b16 %v1037
  %v1366 = vunpack.c.l.b16 %v1038
  %v1367 = vunpack.c.h.b16 %v1038
  %v1368 = vunpack.c.l.b16 %v1039
  %v1369 = vunpack.c.h.b16 %v1039
  %v1370 = vunpack.c.l.b16 %v1040
  %v1371 = vunpack.c.h.b16 %v1040
  %v1372 = vunpack.c.l.b16 %v1041
  %v1373 = vunpack.c.h.b16 %v1041
  %v1374 = vunpack.c.l.b16 %v1042
  %v1375 = vunpack.c.h.b16 %v1042
  %v1376 = vunpack.c.l.b16 %v1043
  %v1377 = vunpack.c.h.b16 %v1043
  %v1378 = vunpack.c.l.b16 %v1044
  %v1379 = vunpack.c.h.b16 %v1044
  %v1380 = vunpack.c.l.b16 %v1045
  %v1381 = vunpack.c.h.b16 %v1045
  %v1382 = vunpack.c.l.b16 %v1046
  %v1383 = vunpack.c.h.b16 %v1046
  %v1384 = vunpack.c.l.b16 %v1047
  %v1385 = vunpack.c.h.b16 %v1047
  %v1386 = vunpack.c.l.b16 %v1048
  %v1387 = vunpack.c.h.b16 %v1048
  %v1388 = vunpack.c.l.b16 %v1049
  %v1389 = vunpack.c.h.b16 %v1049
  %v1390 = vunpack.c.l.b16 %v1050
  %v1391 = vunpack.c.h.b16 %v1050
  %v1392 = vunpack.c.l.b16 %v1051
  %v1393 = vunpack.c.h.b16 %v1051
  %v1394 = vunpack.c.l.b16 %v1052
  %v1395 = vunpack.c.h.b16 %v1052
  %v1396 = vunpack.c.l.b16 %v1053
  %v1397 = vunpack.c.h.b16 %v1053
  %v1398 = vunpack.c.l.b16 %v1054
  %v1399 = vunpack.c.h.b16 %v1054
  %v1400 = vunpack.c.l.b16 %v1055
  %v1401 = vunpack.c.h.b16 %v1055
  %v1402 = vunpack.c.l.b16 %v1056
  %v1403 = vunpack.c.h.b16 %v1056
  %v1404 = vunpack.c.l.b16 %v1057
  %v1405 = vunpack.c.h.b16 %v1057
  %v1406 = vunpack.c.l.b16 %v1058
  %v1407 = vunpack.c.h.b16 %v1058
  %v1408 = vunpack.c.l.b16 %v1059
  %v1409 = vunpack.c.h.b16 %v1059
  %v1410 = vunpack.c.l.b16 %v1060
  %v1411 = vunpack.c.h.b16 %v1060
  %v1412 = vunpack.c.l.b16 %v1061
  %v1413 = vunpack.c.h.b16 %v1061
  %v1414 = vunpack.c.l.b16 %v1062
  %v1415 = vunpack.c.h.b16 %v1062
  %v1416 = vunpack.c.l.b16 %v1063
  %v1417 = vunpack.c.h.b16 %v1063
  %v1418 = vunpack.c.l.b16 %v1064
  %v1419 = vunpack.c.h.b16 %v1064
  %v1420 = vunpack.c.l.b16 %v1065
  %v1421 = vunpack.c.h.b16 %v1065
  %v1422 = vunpack.c.l.b16 %v1066
  %v1423 = vunpack.c.h.b16 %v1066
  %v1424 = vunpack.c.l.b16 %v1067
  %v1425 = vunpack.c.h.b16 %v1067
  %v1426 = vunpack.c.l.b16 %v1068
  %v1427 = vunpack.c.h.b16 %v1068
  %v1428 = vunpack.c.l.b16 %v1069
  %v1429 = vunpack.c.h.b16 %v1069
  %v1430 = vunpack.c.l.b16 %v1070
  %v1431 = vunpack.c.h.b16 %v1070
  %v1432 = vunpack.c.l.b16 %v1071
  %v1433 = vunpack.c.h.b16 %v1071
  %v1434 = vunpack.c.l.b16 %v1072
  %v1435 = vunpack.c.h.b16 %v1072
  %v1436 = vunpack.c.l.b16 %v1073
  %v1437 = vunpack.c.h.b16 %v1073
  %v1438 = vunpack.c.l.b16 %v1074
  %v1439 = vunpack.c.h.b16 %v1074
  %v1440 = vunpack.c.l.b16 %v1075
  %v1441 = vunpack.c.h.b16 %v1075
  %v1442 = vunpack.c.l.b16 %v1076
  %v1443 = vunpack.c.h.b16 %v1076
  %v1444 = vunpack.c.l.b16 %v1077
  %v1445 = vunpack.c.h.b16 %v1077
  %v1446 = vunpack.c.l.b16 %v1078
  %v1447 = vunpack.c.h.b16 %v1078
  %v1448 = vunpack.c.l.b16 %v1079
  %v1449 = vunpack.c.h.b16 %v1079
  %v1450 = vunpack.c.l.b16 %v1080
  %v1451 = vunpack.c.h.b16 %v1080
  %v1452 = vunpack.c.l.b16 %v1081
  %v1453 = vunpack.c.h.b16 %v1081
  %v1454 = vunpack.c.l.b16 %v1082
  %v1455 = vunpack.c.h.b16 %v1082
  %v1456 = vunpack.c.l.b16 %v1083
  %v1457 = vunpack.c.h.b16 %v1083
  %v1458 = vunpack.c.l.b16 %v1084
  %v1459 = vunpack.c.h.b16 %v1084
  %v1460 = vunpack.c.l.b16 %v1085
  %v1461 = vunpack.c.h.b16 %v1085
  %v1462 = vunpack.c.l.b16 %v1086
  %v1463 = vunpack.c.h.b16 %v1086
  %v1464 = vunpack.c.l.b16 %v1087
  %v1465 = vunpack.c.h.b16 %v1087
  %v1466 = vunpack.c.l.b16 %v1088
  %v1467 = vunpack.c.h.b16 %v1088
  %v1468 = vunpack.c.l.b16 %v1089
  %v1469 = vunpack.c.h.b16 %v1089
  %v1470 = vunpack.c.l.b16 %v1090
  %v1471 = vunpack.c.h.b16 %v1090
  %v1472 = vunpack.c.l.b16 %v1091
  %v1473 = vunpack.c.h.b16 %v1091
  %v1474 = vunpack.c.l.b16 %v1092
  %v1475 = vunpack.c.h.b16 %v1092
  %v1476 = vunpack.c.l.b16 %v1093
  %v1477 = vunpack.c.h.b16 %v1093
  %v1478 = vunpack.c.l.b16 %v1094
  %v1479 = vunpack.c.h.b16 %v1094
  %v1480 = vunpack.c.l.b16 %v1095
  %v1481 = vunpack.c.h.b16 %v1095
  %v1482 = vunpack.c.l.b16 %v1096
  %v1483 = vunpack.c.h.b16 %v1096
  %v1484 = vunpack.c.l.b16 %v1097
  %v1485 = vunpack.c.h.b16 %v1097
  %v1486 = vunpack.c.l.b16 %v1098
  %v1487 = vunpack.c.h.b16 %v1098
  %v1488 = vunpack.c.l.b16 %v1099
  %v1489 = vunpack.c.h.b16 %v1099
  %v1490 = vpack.c.b16 %v1236, %v1234
  %v1491 = vpack.c.b16 %v1237, %v1235
  %v1492 = vpack.c.b16 %v1240, %v1238
  %v1493 = vpack.c.b16 %v1241, %v1239
  %v1494 = vpack.c.b16 %v1244, %v1242
  %v1495 = vpack.c.b16 %v1245, %v1243
  %v1496 = vpack.c.b16 %v1248, %v1246
  %v1497 = vpack.c.b16 %v1249, %v1247
  %v1498 = vpack.c.b16 %v1252, %v1250
  %v1499 = vpack.c.b16 %v1253, %v1251
  %v1500 = vpack.c.b16 %v1256, %v1254
  %v1501 = vpack.c.b16 %v1257, %v1255
  %v1502 = vpack.c.b16 %v1260, %v1258
  %v1503 = vpack.c.b16 %v1261, %v1259
  %v1504 = vpack.c.b16 %v1264, %v1262
  %v1505 = vpack.c.b16 %v1265, %v1263
  %v1506 = vpack.c.b16 %v1268, %v1266
  %v1507 = vpack.c.b16 %v1269, %v1267
  %v1508 = vpack.c.b16 %v1272, %v1270
  %v1509 = vpack.c.b16 %v1273, %v1271
  %v1510 = vpack.c.b16 %v1276, %v1274
  %v1511 = vpack.c.b16 %v1277, %v1275
  %v1512 = vpack.c.b16 %v1280, %v1278
  %v1513 = vpack.c.b16 %v1281, %v1279
  %v1514 = vpack.c.b16 %v1284, %v1282
  %v1515 = vpack.c.b16 %v1285, %v1283
  %v1516 = vpack.c.b16 %v1288, %v1286
  %v1517 = vpack.c.b16 %v1289, %v1287
  %v1518 = vpack.c.b16 %v1292, %v1290
  %v1519 = vpack.c.b16 %v1293, %v1291
  %v1520 = vpack.c.b16 %v1296, %v1294
  %v1521 = vpack.c.b16 %v1297, %v1295
  %v1522 = vpack.c.b16 %v1300, %v1298
  %v1523 = vpack.c.b16 %v1301, %v1299
  %v1524 = vpack.c.b16 %v1304, %v1302
  %v1525 = vpack.c.b16 %v1305, %v1303
  %v1526 = vpack.c.b16 %v1308, %v1306
  %v1527 = vpack.c.b16 %v1309, %v1307
  %v1528 = vpack.c.b16 %v1312, %v1310
  %v1529 = vpack.c.b16 %v1313, %v1311
  %v1530 = vpack.c.b16 %v1316, %v1314
  %v1531 = vpack.c.b16 %v1317, %v1315
  %v1532 = vpack.c.b16 %v1320, %v1318
  %v1533 = vpack.c.b16 %v1321, %v1319
  %v1534 = vpack.c.b16 %v1324, %v1322
  %v1535 = vpack.c.b16 %v1325, %v1323
  %v1536 = vpack.c.b16 %v1328, %v1326
  %v1537 = vpack.c.b16 %v1329, %v1327
  %v1538 = vpack.c.b16 %v1332, %v1330
  %v1539 = vpack.c.b16 %v1333, %v1331
  %v1540 = vpack.c.b16 %v1336, %v1334
  %v1541 = vpack.c.b16 %v1337, %v1335
  %v1542 = vpack.c.b16 %v1340, %v1338
  %v1543 = vpack.c.b16 %v1341, %v1339
  %v1544 = vpack.c.b16 %v1344, %v1342
  %v1545 = vpack.c.b16 %v1345, %v1343
  %v1546 = vpack.c.b16 %v1348, %v1346
  %v1547 = vpack.c.b16 %v1349, %v1347
  %v1548 = vpack.c.b16 %v1352, %v1350
  %v1549 = vpack.c.b16 %v1353, %v1351
  %v1550 = vpack.c.b16 %v1356, %v1354
  %v1551 = vpack.c.b16 %v1357, %v1355
  %v1552 = vpack.c.b16 %v1360, %v1358
  %v1553 = vpack.c.b16 %v1361, %v1359
  %v1554 = vpack.c.b16 %v1364, %v1362
  %v1555 = vpack.c.b16 %v1365, %v1363
  %v1556 = vpack.c.b16 %v1368, %v1366
  %v1557 = vpack.c.b16 %v1369, %v1367
  %v1558 = vpack.c.b16 %v1372, %v1370
  %v1559 = vpack.c.b16 %v1373, %v1371
  %v1560 = vpack.c.b16 %v1376, %v1374
  %v1561 = vpack.c.b16 %v1377, %v1375
  %v1562 = vpack.c.b16 %v1380, %v1378
  %v1563 = vpack.c.b16 %v1381, %v1379
  %v1564 = vpack.c.b16 %v1384, %v1382
  %v1565 = vpack.c.b16 %v1385, %v1383
  %v1566 = vpack.c.b16 %v1388, %v1386
  %v1567 = vpack.c.b16 %v1389, %v1387
  %v1568 = vpack.c.b16 %v1392, %v1390
  %v1569 = vpack.c.b16 %v1393, %v1391
  %v1570 = vpack.c.b16 %v1396, %v1394
  %v1571 = vpack.c.b16 %v1397, %v1395
  %v1572 = vpack.c.b16 %v1400, %v1398
  %v1573 = vpack.c.b16 %v1401, %v1399
  %v1574 = vpack.c.b16 %v1404, %v1402
  %v1575 = vpack.c.b16 %v1405, %v1403
  %v1576 = vpack.c.b16 %v1408, %v1406
  %v1577 = vpack.c.b16 %v1409, %v1407
  %v1578 = vpack.c.b16 %v1412, %v1410
  %v1579 = vpack.c.b16 %v1413, %v1411
  %v1580 = vpack.c.b16 %v1416, %v1414
  %v1581 = vpack.c.b16 %v1417, %v1415
  %v1582 = vpack.c.b16 %v1420, %v1418
  %v1583 = vpack.c.b16 %v1421, %v1419
  %v1584 = vpack.c.b16 %v1424, %v1422
  %v1585 = vpack.c.b16 %v1425, %v1423
  %v1586 = vpack.c.b16 %v1428, %v1426
  %v1587 = vpack.c.b16 %v1429, %v1427
  %v1588 = vpack.c.b16 %v1432, %v1430
  %v1589 = vpack.c.b16 %v1433, %v1431
  %v1590 = vpack.c.b16 %v1436, %v1434
  %v1591 = vpack.c.b16 %v1437, %v1435
  %v1592 = vpack.c.b16 %v1440, %v1438
  %v1593 = vpack.c.b16 %v1441, %v1439
  %v1594 = vpack.c.b16 %v1444, %v1442
  %v1595 = vpack.c.b16 %v1445, %v1443
  %v1596 = vpack.c.b16 %v1448, %v1446
  %v1597 = vpack.c.b16 %v1449, %v1447
  %v1598 = vpack.c.b16 %v1452, %v1450
  %v1599 = vpack.c.b16 %v1453, %v1451
  %v1600 = vpack.c.b16 %v1456, %v1454
  %v1601 = vpack.c.b16 %v1457, %v1455
  %v1602 = vpack.c.b16 %v1460, %v1458
  %v1603 = vpack.c.b16 %v1461, %v1459
  %v1604 = vpack.c.b16 %v1464, %v1462
  %v1605 = vpack.c.b16 %v1465, %v1463
  %v1606 = vpack.c.b16 %v1468, %v1466
  %v1607 = vpack.c.b16 %v1469, %v1467
  %v1608 = vpack.c.b16 %v1472, %v1470
  %v1609 = vpack.c.b16 %v1473, %v1471
  %v1610 = vpack.c.b16 %v1476, %v1474
  %v1611 = vpack.c.b16 %v1477, %v1475
  %v1612 = vpack.c.b16 %v1480, %v1478
  %v1613 = vpack.c.b16 %v1481, %v1479
  %v1614 = vpack.c.b16 %v1484, %v1482
  %v1615 = vpack.c.b16 %v1485, %v1483
  %v1616 = vpack.c.b16 %v1488, %v1486
  %v1617 = vpack.c.b16 %v1489, %v1487
  %1746 = vmatpush.bf16.msra.mxu0 %v1504
  %1747 = vmatpush.bf16.msra.mxu0 %v1502
  %1748 = vmatpush.bf16.msra.mxu0 %v1500
  %1749 = vmatpush.bf16.msra.mxu0 %v1498
  %1750 = vmatpush.bf16.msra.mxu0 %v1496
  %1751 = vmatpush.bf16.msra.mxu0 %v1494
  %1752 = vmatpush.bf16.msra.mxu0 %v1492
  %1753 = vmatpush.bf16.msra.mxu0 %v1490
  %1754 = vmatmul.bf16.gmra.mxu0 %v903
  %v1755 = vpop.f32.mrf.mxu0
  %v1756 = vadd.f32 %v1102, %v1755
  %v1757 = vpop.f32.mrf.mxu0
  %v1758 = vadd.f32 %v1102, %v1757
  %1759 = vmatmul.bf16.gmra.mxu0 %v905
  %v1760 = vpop.f32.mrf.mxu0
  %v1761 = vadd.f32 %v1102, %v1760
  %v1762 = vpop.f32.mrf.mxu0
  %v1763 = vadd.f32 %v1102, %v1762
  %1764 = vmatmul.bf16.gmra.mxu0 %v907
  %v1765 = vpop.f32.mrf.mxu0
  %v1766 = vadd.f32 %v1102, %v1765
  %v1767 = vpop.f32.mrf.mxu0
  %1768 = vdwg.mxu0
  %1769 = vmatpush.bf16.msra.mxu0 %v1520
  %1770 = vmatpush.bf16.msra.mxu0 %v1518
  %1771 = vmatpush.bf16.msra.mxu0 %v1516
  %1772 = vmatpush.bf16.msra.mxu0 %v1514
  %1773 = vmatpush.bf16.msra.mxu0 %v1512
  %1774 = vmatpush.bf16.msra.mxu0 %v1510
  %1775 = vmatpush.bf16.msra.mxu0 %v1508
  %1776 = vmatpush.bf16.msra.mxu0 %v1506
  %1777 = vmatmul.bf16.gmra.mxu0 %v904
  %v1778 = vpop.f32.mrf.mxu0
  %v1779 = vadd.f32 %v1756, %v1778
  %v1780 = vpop.f32.mrf.mxu0
  %v1781 = vadd.f32 %v1758, %v1780
  %1782 = vmatmul.bf16.gmra.mxu0 %v906
  %v1783 = vpop.f32.mrf.mxu0
  %v1784 = vadd.f32 %v1761, %v1783
  %v1785 = vpop.f32.mrf.mxu0
  %v1786 = vadd.f32 %v1763, %v1785
  %1787 = vmatmul.bf16.gmra.mxu0 %v908
  %v1788 = vpop.f32.mrf.mxu0
  %v1789 = vadd.f32 %v1766, %v1788
  %v1790 = vpop.f32.mrf.mxu0
  %1791 = vdwg.mxu0
  %1792 = vmatpush.bf16.msra.mxu0 %v1536
  %1793 = vmatpush.bf16.msra.mxu0 %v1534
  %1794 = vmatpush.bf16.msra.mxu0 %v1532
  %1795 = vmatpush.bf16.msra.mxu0 %v1530
  %1796 = vmatpush.bf16.msra.mxu0 %v1528
  %1797 = vmatpush.bf16.msra.mxu0 %v1526
  %1798 = vmatpush.bf16.msra.mxu0 %v1524
  %1799 = vmatpush.bf16.msra.mxu0 %v1522
  %1800 = vmatmul.bf16.gmra.mxu0 %v930
  %v1801 = vpop.f32.mrf.mxu0
  %v1802 = vadd.f32 %v1779, %v1801
  %v1803 = vpop.f32.mrf.mxu0
  %v1804 = vadd.f32 %v1781, %v1803
  %1805 = vmatmul.bf16.gmra.mxu0 %v932
  %v1806 = vpop.f32.mrf.mxu0
  %v1807 = vadd.f32 %v1784, %v1806
  %v1808 = vpop.f32.mrf.mxu0
  %v1809 = vadd.f32 %v1786, %v1808
  %1810 = vmatmul.bf16.gmra.mxu0 %v934
  %v1811 = vpop.f32.mrf.mxu0
  %v1812 = vadd.f32 %v1789, %v1811
  %v1813 = vpop.f32.mrf.mxu0
  %1814 = vdwg.mxu0
  %1815 = vmatpush.bf16.msra.mxu0 %v1552
  %1816 = vmatpush.bf16.msra.mxu0 %v1550
  %1817 = vmatpush.bf16.msra.mxu0 %v1548
  %1818 = vmatpush.bf16.msra.mxu0 %v1546
  %1819 = vmatpush.bf16.msra.mxu0 %v1544
  %1820 = vmatpush.bf16.msra.mxu0 %v1542
  %1821 = vmatpush.bf16.msra.mxu0 %v1540
  %1822 = vmatpush.bf16.msra.mxu0 %v1538
  %1823 = vmatmul.bf16.gmra.mxu0 %v931
  %v1824 = vpop.f32.mrf.mxu0
  %v1825 = vadd.f32 %v1802, %v1824
  %v1826 = vpop.f32.mrf.mxu0
  %v1827 = vadd.f32 %v1804, %v1826
  %1828 = vmatmul.bf16.gmra.mxu0 %v933
  %v1829 = vpop.f32.mrf.mxu0
  %v1830 = vadd.f32 %v1807, %v1829
  %v1831 = vpop.f32.mrf.mxu0
  %v1832 = vadd.f32 %v1809, %v1831
  %1833 = vmatmul.bf16.gmra.mxu0 %v935
  %v1834 = vpop.f32.mrf.mxu0
  %v1835 = vadd.f32 %v1812, %v1834
  %v1836 = vpop.f32.mrf.mxu0
  %1837 = vdwg.mxu0
  %1838 = vmatpush.bf16.msra.mxu0 %v1568
  %1839 = vmatpush.bf16.msra.mxu0 %v1566
  %1840 = vmatpush.bf16.msra.mxu0 %v1564
  %1841 = vmatpush.bf16.msra.mxu0 %v1562
  %1842 = vmatpush.bf16.msra.mxu0 %v1560
  %1843 = vmatpush.bf16.msra.mxu0 %v1558
  %1844 = vmatpush.bf16.msra.mxu0 %v1556
  %1845 = vmatpush.bf16.msra.mxu0 %v1554
  %1846 = vmatmul.bf16.gmra.mxu0 %v945
  %v1847 = vpop.f32.mrf.mxu0
  %v1848 = vadd.f32 %v1825, %v1847
  %v1849 = vpop.f32.mrf.mxu0
  %v1850 = vadd.f32 %v1827, %v1849
  %1851 = vmatmul.bf16.gmra.mxu0 %v947
  %v1852 = vpop.f32.mrf.mxu0
  %v1853 = vadd.f32 %v1830, %v1852
  %v1854 = vpop.f32.mrf.mxu0
  %v1855 = vadd.f32 %v1832, %v1854
  %1856 = vmatmul.bf16.gmra.mxu0 %v949
  %v1857 = vpop.f32.mrf.mxu0
  %v1858 = vadd.f32 %v1835, %v1857
  %v1859 = vpop.f32.mrf.mxu0
  %1860 = vdwg.mxu0
  %1861 = vmatpush.bf16.msra.mxu0 %v1584
  %1862 = vmatpush.bf16.msra.mxu0 %v1582
  %1863 = vmatpush.bf16.msra.mxu0 %v1580
  %1864 = vmatpush.bf16.msra.mxu0 %v1578
  %1865 = vmatpush.bf16.msra.mxu0 %v1576
  %1866 = vmatpush.bf16.msra.mxu0 %v1574
  %1867 = vmatpush.bf16.msra.mxu0 %v1572
  %1868 = vmatpush.bf16.msra.mxu0 %v1570
  %1869 = vmatmul.bf16.gmra.mxu0 %v946
  %v1870 = vpop.f32.mrf.mxu0
  %v1871 = vadd.f32 %v1848, %v1870
  %v1872 = vpop.f32.mrf.mxu0
  %v1873 = vadd.f32 %v1850, %v1872
  %1874 = vmatmul.bf16.gmra.mxu0 %v948
  %v1875 = vpop.f32.mrf.mxu0
  %v1876 = vadd.f32 %v1853, %v1875
  %v1877 = vpop.f32.mrf.mxu0
  %v1878 = vadd.f32 %v1855, %v1877
  %1879 = vmatmul.bf16.gmra.mxu0 %v950
  %v1880 = vpop.f32.mrf.mxu0
  %v1881 = vadd.f32 %v1858, %v1880
  %v1882 = vpop.f32.mrf.mxu0
  %1883 = vdwg.mxu0
  %1884 = vmatpush.bf16.msra.mxu0 %v1600
  %1885 = vmatpush.bf16.msra.mxu0 %v1598
  %1886 = vmatpush.bf16.msra.mxu0 %v1596
  %1887 = vmatpush.bf16.msra.mxu0 %v1594
  %1888 = vmatpush.bf16.msra.mxu0 %v1592
  %1889 = vmatpush.bf16.msra.mxu0 %v1590
  %1890 = vmatpush.bf16.msra.mxu0 %v1588
  %1891 = vmatpush.bf16.msra.mxu0 %v1586
  %1892 = vmatmul.bf16.gmra.mxu0 %v960
  %v1893 = vpop.f32.mrf.mxu0
  %v1894 = vadd.f32 %v1871, %v1893
  %v1895 = vpop.f32.mrf.mxu0
  %v1896 = vadd.f32 %v1873, %v1895
  %1897 = vmatmul.bf16.gmra.mxu0 %v962
  %v1898 = vpop.f32.mrf.mxu0
  %v1899 = vadd.f32 %v1876, %v1898
  %v1900 = vpop.f32.mrf.mxu0
  %v1901 = vadd.f32 %v1878, %v1900
  %1902 = vmatmul.bf16.gmra.mxu0 %v964
  %v1903 = vpop.f32.mrf.mxu0
  %v1904 = vadd.f32 %v1881, %v1903
  %v1905 = vpop.f32.mrf.mxu0
  %1906 = vdwg.mxu0
  %1907 = vmatpush.bf16.msra.mxu0 %v1616
  %1908 = vmatpush.bf16.msra.mxu0 %v1614
  %1909 = vmatpush.bf16.msra.mxu0 %v1612
  %1910 = vmatpush.bf16.msra.mxu0 %v1610
  %1911 = vmatpush.bf16.msra.mxu0 %v1608
  %1912 = vmatpush.bf16.msra.mxu0 %v1606
  %1913 = vmatpush.bf16.msra.mxu0 %v1604
  %1914 = vmatpush.bf16.msra.mxu0 %v1602
  %1915 = vmatmul.bf16.gmra.mxu0 %v961
  %v1916 = vpop.f32.mrf.mxu0
  %v1917 = vadd.f32 %v1894, %v1916
  %v1918 = vpop.f32.mrf.mxu0
  %v1919 = vadd.f32 %v1896, %v1918
  %1920 = vmatmul.bf16.gmra.mxu0 %v963
  %v1921 = vpop.f32.mrf.mxu0
  %v1922 = vadd.f32 %v1899, %v1921
  %v1923 = vpop.f32.mrf.mxu0
  %v1924 = vadd.f32 %v1901, %v1923
  %1925 = vmatmul.bf16.gmra.mxu0 %v965
  %v1926 = vpop.f32.mrf.mxu0
  %v1927 = vadd.f32 %v1904, %v1926
  %v1928 = vpop.f32.mrf.mxu0
  %1929 = vdwg.mxu0
  %1930 = vmatpush.bf16.msra.mxu0 %v1505
  %1931 = vmatpush.bf16.msra.mxu0 %v1503
  %1932 = vmatpush.bf16.msra.mxu0 %v1501
  %1933 = vmatpush.bf16.msra.mxu0 %v1499
  %1934 = vmatpush.bf16.msra.mxu0 %v1497
  %1935 = vmatpush.bf16.msra.mxu0 %v1495
  %1936 = vmatpush.bf16.msra.mxu0 %v1493
  %1937 = vmatpush.bf16.msra.mxu0 %v1491
  %1938 = vmatmul.bf16.gmra.mxu0 %v903
  %v1939 = vpop.f32.mrf.mxu0
  %v1940 = vadd.f32 %v1103, %v1939
  %v1941 = vpop.f32.mrf.mxu0
  %v1942 = vadd.f32 %v1103, %v1941
  %1943 = vmatmul.bf16.gmra.mxu0 %v905
  %v1944 = vpop.f32.mrf.mxu0
  %v1945 = vadd.f32 %v1103, %v1944
  %v1946 = vpop.f32.mrf.mxu0
  %v1947 = vadd.f32 %v1103, %v1946
  %1948 = vmatmul.bf16.gmra.mxu0 %v907
  %v1949 = vpop.f32.mrf.mxu0
  %v1950 = vadd.f32 %v1103, %v1949
  %v1951 = vpop.f32.mrf.mxu0
  %1952 = vdwg.mxu0
  %1953 = vmatpush.bf16.msra.mxu0 %v1521
  %1954 = vmatpush.bf16.msra.mxu0 %v1519
  %1955 = vmatpush.bf16.msra.mxu0 %v1517
  %1956 = vmatpush.bf16.msra.mxu0 %v1515
  %1957 = vmatpush.bf16.msra.mxu0 %v1513
  %1958 = vmatpush.bf16.msra.mxu0 %v1511
  %1959 = vmatpush.bf16.msra.mxu0 %v1509
  %1960 = vmatpush.bf16.msra.mxu0 %v1507
  %1961 = vmatmul.bf16.gmra.mxu0 %v904
  %v1962 = vpop.f32.mrf.mxu0
  %v1963 = vadd.f32 %v1940, %v1962
  %v1964 = vpop.f32.mrf.mxu0
  %v1965 = vadd.f32 %v1942, %v1964
  %1966 = vmatmul.bf16.gmra.mxu0 %v906
  %v1967 = vpop.f32.mrf.mxu0
  %v1968 = vadd.f32 %v1945, %v1967
  %v1969 = vpop.f32.mrf.mxu0
  %v1970 = vadd.f32 %v1947, %v1969
  %1971 = vmatmul.bf16.gmra.mxu0 %v908
  %v1972 = vpop.f32.mrf.mxu0
  %v1973 = vadd.f32 %v1950, %v1972
  %v1974 = vpop.f32.mrf.mxu0
  %1975 = vdwg.mxu0
  %1976 = vmatpush.bf16.msra.mxu0 %v1537
  %1977 = vmatpush.bf16.msra.mxu0 %v1535
  %1978 = vmatpush.bf16.msra.mxu0 %v1533
  %1979 = vmatpush.bf16.msra.mxu0 %v1531
  %1980 = vmatpush.bf16.msra.mxu0 %v1529
  %1981 = vmatpush.bf16.msra.mxu0 %v1527
  %1982 = vmatpush.bf16.msra.mxu0 %v1525
  %1983 = vmatpush.bf16.msra.mxu0 %v1523
  %1984 = vmatmul.bf16.gmra.mxu0 %v930
  %v1985 = vpop.f32.mrf.mxu0
  %v1986 = vadd.f32 %v1963, %v1985
  %v1987 = vpop.f32.mrf.mxu0
  %v1988 = vadd.f32 %v1965, %v1987
  %1989 = vmatmul.bf16.gmra.mxu0 %v932
  %v1990 = vpop.f32.mrf.mxu0
  %v1991 = vadd.f32 %v1968, %v1990
  %v1992 = vpop.f32.mrf.mxu0
  %v1993 = vadd.f32 %v1970, %v1992
  %1994 = vmatmul.bf16.gmra.mxu0 %v934
  %v1995 = vpop.f32.mrf.mxu0
  %v1996 = vadd.f32 %v1973, %v1995
  %v1997 = vpop.f32.mrf.mxu0
  %1998 = vdwg.mxu0
  %1999 = vmatpush.bf16.msra.mxu0 %v1553
  %2000 = vmatpush.bf16.msra.mxu0 %v1551
  %2001 = vmatpush.bf16.msra.mxu0 %v1549
  %2002 = vmatpush.bf16.msra.mxu0 %v1547
  %2003 = vmatpush.bf16.msra.mxu0 %v1545
  %2004 = vmatpush.bf16.msra.mxu0 %v1543
  %2005 = vmatpush.bf16.msra.mxu0 %v1541
  %2006 = vmatpush.bf16.msra.mxu0 %v1539
  %2007 = vmatmul.bf16.gmra.mxu0 %v931
  %v2008 = vpop.f32.mrf.mxu0
  %v2009 = vadd.f32 %v1986, %v2008
  %v2010 = vpop.f32.mrf.mxu0
  %v2011 = vadd.f32 %v1988, %v2010
  %2012 = vmatmul.bf16.gmra.mxu0 %v933
  %v2013 = vpop.f32.mrf.mxu0
  %v2014 = vadd.f32 %v1991, %v2013
  %v2015 = vpop.f32.mrf.mxu0
  %v2016 = vadd.f32 %v1993, %v2015
  %2017 = vmatmul.bf16.gmra.mxu0 %v935
  %v2018 = vpop.f32.mrf.mxu0
  %v2019 = vadd.f32 %v1996, %v2018
  %v2020 = vpop.f32.mrf.mxu0
  %2021 = vdwg.mxu0
  %2022 = vmatpush.bf16.msra.mxu0 %v1569
  %2023 = vmatpush.bf16.msra.mxu0 %v1567
  %2024 = vmatpush.bf16.msra.mxu0 %v1565
  %2025 = vmatpush.bf16.msra.mxu0 %v1563
  %2026 = vmatpush.bf16.msra.mxu0 %v1561
  %2027 = vmatpush.bf16.msra.mxu0 %v1559
  %2028 = vmatpush.bf16.msra.mxu0 %v1557
  %2029 = vmatpush.bf16.msra.mxu0 %v1555
  %2030 = vmatmul.bf16.gmra.mxu0 %v945
  %v2031 = vpop.f32.mrf.mxu0
  %v2032 = vadd.f32 %v2009, %v2031
  %v2033 = vpop.f32.mrf.mxu0
  %v2034 = vadd.f32 %v2011, %v2033
  %2035 = vmatmul.bf16.gmra.mxu0 %v947
  %v2036 = vpop.f32.mrf.mxu0
  %v2037 = vadd.f32 %v2014, %v2036
  %v2038 = vpop.f32.mrf.mxu0
  %v2039 = vadd.f32 %v2016, %v2038
  %2040 = vmatmul.bf16.gmra.mxu0 %v949
  %v2041 = vpop.f32.mrf.mxu0
  %v2042 = vadd.f32 %v2019, %v2041
  %v2043 = vpop.f32.mrf.mxu0
  %2044 = vdwg.mxu0
  %2045 = vmatpush.bf16.msra.mxu0 %v1585
  %2046 = vmatpush.bf16.msra.mxu0 %v1583
  %2047 = vmatpush.bf16.msra.mxu0 %v1581
  %2048 = vmatpush.bf16.msra.mxu0 %v1579
  %2049 = vmatpush.bf16.msra.mxu0 %v1577
  %2050 = vmatpush.bf16.msra.mxu0 %v1575
  %2051 = vmatpush.bf16.msra.mxu0 %v1573
  %2052 = vmatpush.bf16.msra.mxu0 %v1571
  %2053 = vmatmul.bf16.gmra.mxu0 %v946
  %v2054 = vpop.f32.mrf.mxu0
  %v2055 = vadd.f32 %v2032, %v2054
  %v2056 = vpop.f32.mrf.mxu0
  %v2057 = vadd.f32 %v2034, %v2056
  %2058 = vmatmul.bf16.gmra.mxu0 %v948
  %v2059 = vpop.f32.mrf.mxu0
  %v2060 = vadd.f32 %v2037, %v2059
  %v2061 = vpop.f32.mrf.mxu0
  %v2062 = vadd.f32 %v2039, %v2061
  %2063 = vmatmul.bf16.gmra.mxu0 %v950
  %v2064 = vpop.f32.mrf.mxu0
  %v2065 = vadd.f32 %v2042, %v2064
  %v2066 = vpop.f32.mrf.mxu0
  %2067 = vdwg.mxu0
  %2068 = vmatpush.bf16.msra.mxu0 %v1601
  %2069 = vmatpush.bf16.msra.mxu0 %v1599
  %2070 = vmatpush.bf16.msra.mxu0 %v1597
  %2071 = vmatpush.bf16.msra.mxu0 %v1595
  %2072 = vmatpush.bf16.msra.mxu0 %v1593
  %2073 = vmatpush.bf16.msra.mxu0 %v1591
  %2074 = vmatpush.bf16.msra.mxu0 %v1589
  %2075 = vmatpush.bf16.msra.mxu0 %v1587
  %2076 = vmatmul.bf16.gmra.mxu0 %v960
  %v2077 = vpop.f32.mrf.mxu0
  %v2078 = vadd.f32 %v2055, %v2077
  %v2079 = vpop.f32.mrf.mxu0
  %v2080 = vadd.f32 %v2057, %v2079
  %2081 = vmatmul.bf16.gmra.mxu0 %v962
  %v2082 = vpop.f32.mrf.mxu0
  %v2083 = vadd.f32 %v2060, %v2082
  %v2084 = vpop.f32.mrf.mxu0
  %v2085 = vadd.f32 %v2062, %v2084
  %2086 = vmatmul.bf16.gmra.mxu0 %v964
  %v2087 = vpop.f32.mrf.mxu0
  %v2088 = vadd.f32 %v2065, %v2087
  %v2089 = vpop.f32.mrf.mxu0
  %2090 = vdwg.mxu0
  %2091 = vmatpush.bf16.msra.mxu0 %v1617
  %2092 = vmatpush.bf16.msra.mxu0 %v1615
  %2093 = vmatpush.bf16.msra.mxu0 %v1613
  %2094 = vmatpush.bf16.msra.mxu0 %v1611
  %2095 = vmatpush.bf16.msra.mxu0 %v1609
  %2096 = vmatpush.bf16.msra.mxu0 %v1607
  %2097 = vmatpush.bf16.msra.mxu0 %v1605
  %2098 = vmatpush.bf16.msra.mxu0 %v1603
  %2099 = vmatmul.bf16.gmra.mxu0 %v961
  %v2100 = vpop.f32.mrf.mxu0
  %v2101 = vadd.f32 %v2078, %v2100
  %v2102 = vpop.f32.mrf.mxu0
  %v2103 = vadd.f32 %v2080, %v2102
  %2104 = vmatmul.bf16.gmra.mxu0 %v963
  %v2105 = vpop.f32.mrf.mxu0
  %v2106 = vadd.f32 %v2083, %v2105
  %v2107 = vpop.f32.mrf.mxu0
  %v2108 = vadd.f32 %v2085, %v2107
  %2109 = vmatmul.bf16.gmra.mxu0 %v965
  %v2110 = vpop.f32.mrf.mxu0
  %v2111 = vadd.f32 %v2088, %v2110
  %v2112 = vpop.f32.mrf.mxu0
  %2113 = vdwg.mxu0
  %v2114 = vmax.f32 %v1917, 0.0
  %v2115 = vmax.f32 %v2101, 0.0
  %v2116 = vmax.f32 %v1919, 0.0
  %v2117 = vmax.f32 %v2103, 0.0
  %v2118 = vmax.f32 %v1922, 0.0
  %v2119 = vmax.f32 %v2106, 0.0
  %v2120 = vmax.f32 %v1924, 0.0
  %v2121 = vmax.f32 %v2108, 0.0
  %v2122 = vmax.f32 %v1927, 0.0
  %v2123 = vmax.f32 %v2111, 0.0
  %v2124 = vmax.f32 %v2114, %v2116
  %v2125 = vmax.f32 %v2115, %v2117
  %v2126 = vmax.f32 %v2116, %v2118
  %v2127 = vmax.f32 %v2117, %v2119
  %v2128 = vmax.f32 %v2118, %v2120
  %v2129 = vmax.f32 %v2119, %v2121
  %v2130 = vmax.f32 %v2120, %v2122
  %v2131 = vmax.f32 %v2121, %v2123
  %2140 = vrot.lane.b32.xlu0 %v2124, 96
  %v2141 = vpop.permute.xlu0 %2140
  %2142 = vrot.lane.b32.xlu0 %v2125, 96
  %v2143 = vpop.permute.xlu0 %2142
  %2144 = vrot.lane.b32.xlu0 %v2126, 96
  %v2145 = vpop.permute.xlu0 %2144
  %2146 = vrot.lane.b32.xlu0 %v2127, 96
  %v2147 = vpop.permute.xlu0 %2146
  %2148 = vrot.lane.b32.xlu0 %v2128, 96
  %v2149 = vpop.permute.xlu0 %2148
  %2150 = vrot.lane.b32.xlu0 %v2129, 96
  %v2151 = vpop.permute.xlu0 %2150
  %2152 = vrot.lane.b32.xlu0 %v2130, 96
  %v2153 = vpop.permute.xlu0 %2152
  %2154 = vrot.lane.b32.xlu0 %v2131, 96
  %v2155 = vpop.permute.xlu0 %2154
  %vm2156 = vcmask 785408
  %v2157 = vsel %vm2156, %v2141, %v2143
  %v2158 = vsel %vm2156, %v2145, %v2147
  %v2159 = vsel %vm2156, %v2149, %v2151
  %v2160 = vsel %vm2156, %v2153, %v2155
  %v2165 = vmax.f32 %v2124, %v2157
  %v2166 = vmax.f32 %v2126, %v2158
  %v2167 = vmax.f32 %v2128, %v2159
  %v2168 = vmax.f32 %v2130, %v2160
  %v2169 = vld [vmem:[%s5] sm:$0xf]
  %v2170 = vld [vmem:[%s5 + $0x4] sm:$0xf]
  %v2171 = vld [vmem:[%s5 + $0x8] sm:$0xf]
  %v2172 = vld [vmem:[%s5 + $0xc] sm:$0xf]
  %v2173 = vld [vmem:[%s5 + $0x10] sm:$0xf]
  %v2174 = vld [vmem:[%s5 + $0x14] sm:$0xf]
  %v2175 = vld [vmem:[%s5 + $0x18] sm:$0xf]
  %v2176 = vld [vmem:[%s5 + $0x1c] sm:$0xf]
  %v2177 = vld [vmem:[%s5 + $0x20] sm:$0xf]
  %v2178 = vld [vmem:[%s5 + $0x24] sm:$0xf]
  %v2179 = vld [vmem:[%s5 + $0x28] sm:$0xf]
  %v2180 = vld [vmem:[%s5 + $0x2c] sm:$0xf]
  %v2181 = vld [vmem:[%s5 + $0x30] sm:$0xf]
  %v2182 = vld [vmem:[%s5 + $0x34] sm:$0xf]
  %v2183 = vld [vmem:[%s5 + $0x38] sm:$0xf]
  %v2184 = vld [vmem:[%s5 + $0x3c] sm:$0xf]
  %v2185 = vld [vmem:[%s5 + $0x40] sm:$0xf]
  %v2186 = vld [vmem:[%s5 + $0x44] sm:$0xf]
  %v2187 = vld [vmem:[%s5 + $0x48] sm:$0xf]
  %v2188 = vld [vmem:[%s5 + $0x4c] sm:$0xf]
  %v2189 = vld [vmem:[%s5 + $0x50] sm:$0xf]
  %v2190 = vld [vmem:[%s5 + $0x54] sm:$0xf]
  %v2191 = vld [vmem:[%s5 + $0x58] sm:$0xf]
  %v2192 = vld [vmem:[%s5 + $0x5c] sm:$0xf]
  %v2193 = vld [vmem:[%s5 + $0x60] sm:$0xf]
  %v2194 = vld [vmem:[%s5 + $0x64] sm:$0xf]
  %v2195 = vld [vmem:[%s5 + $0x68] sm:$0xf]
  %v2196 = vld [vmem:[%s5 + $0x6c] sm:$0xf]
  %v2197 = vld [vmem:[%s5 + $0x70] sm:$0xf]
  %v2198 = vld [vmem:[%s5 + $0x74] sm:$0xf]
  %v2199 = vld [vmem:[%s5 + $0x78] sm:$0xf]
  %v2200 = vld [vmem:[%s5 + $0x7c] sm:$0xf]
  %v2201 = vld [vmem:[%s5 + $0x80] sm:$0xf]
  %v2202 = vld [vmem:[%s5 + $0x84] sm:$0xf]
  %v2203 = vld [vmem:[%s5 + $0x88] sm:$0xf]
  %v2204 = vld [vmem:[%s5 + $0x8c] sm:$0xf]
  %v2205 = vld [vmem:[%s5 + $0x90] sm:$0xf]
  %v2206 = vld [vmem:[%s5 + $0x94] sm:$0xf]
  %v2207 = vld [vmem:[%s5 + $0x98] sm:$0xf]
  %v2208 = vld [vmem:[%s5 + $0x9c] sm:$0xf]
  %v2209 = vld [vmem:[%s5 + $0xa0] sm:$0xf]
  %v2210 = vld [vmem:[%s5 + $0xa4] sm:$0xf]
  %v2211 = vld [vmem:[%s5 + $0xa8] sm:$0xf]
  %v2212 = vld [vmem:[%s5 + $0xac] sm:$0xf]
  %v2213 = vld [vmem:[%s5 + $0xb0] sm:$0xf]
  %v2214 = vld [vmem:[%s5 + $0xb4] sm:$0xf]
  %v2215 = vld [vmem:[%s5 + $0xb8] sm:$0xf]
  %v2216 = vld [vmem:[%s5 + $0xbc] sm:$0xf]
  %v2217 = vld [vmem:[%s5 + $0xc0] sm:$0xf]
  %v2218 = vld [vmem:[%s5 + $0xc4] sm:$0xf]
  %v2219 = vld [vmem:[%s5 + $0xc8] sm:$0xf]
  %v2220 = vld [vmem:[%s5 + $0xcc] sm:$0xf]
  %v2221 = vld [vmem:[%s5 + $0xd0] sm:$0xf]
  %v2222 = vld [vmem:[%s5 + $0xd4] sm:$0xf]
  %v2223 = vld [vmem:[%s5 + $0xd8] sm:$0xf]
  %v2224 = vld [vmem:[%s5 + $0xdc] sm:$0xf]
  %v2225 = vld [vmem:[%s5 + $0xe0] sm:$0xf]
  %v2226 = vld [vmem:[%s5 + $0xe4] sm:$0xf]
  %v2227 = vld [vmem:[%s5 + $0xe8] sm:$0xf]
  %v2228 = vld [vmem:[%s5 + $0xec] sm:$0xf]
  %v2229 = vld [vmem:[%s5 + $0xf0] sm:$0xf]
  %v2230 = vld [vmem:[%s5 + $0xf4] sm:$0xf]
  %v2231 = vld [vmem:[%s5 + $0xf8] sm:$0xf]
  %v2232 = vld [vmem:[%s5 + $0xfc] sm:$0xf]
  %v2233 = vpack.c.bf16 %v2165, %v2165
  %v2234 = vpack.c.bf16 %v2166, %v2166
  %v2251 = vunpack.c.l.b16 %v2185
  %v2252 = vunpack.c.l.b16 %v2186
  %v2253 = vunpack.c.l.b16 %v2187
  %v2254 = vunpack.c.l.b16 %v2188
  %v2255 = vunpack.c.l.b16 %v2189
  %v2256 = vunpack.c.l.b16 %v2190
  %v2257 = vunpack.c.l.b16 %v2191
  %v2258 = vunpack.c.l.b16 %v2192
  %v2259 = vunpack.c.l.b16 %v2193
  %v2260 = vunpack.c.l.b16 %v2194
  %v2261 = vunpack.c.l.b16 %v2195
  %v2262 = vunpack.c.l.b16 %v2196
  %v2263 = vunpack.c.l.b16 %v2197
  %v2264 = vunpack.c.l.b16 %v2198
  %v2265 = vunpack.c.l.b16 %v2199
  %v2266 = vunpack.c.l.b16 %v2200
  %v2267 = vpack.c.b16 %v2252, %v2251
  %v2268 = vpack.c.b16 %v2254, %v2253
  %v2269 = vpack.c.b16 %v2256, %v2255
  %v2270 = vpack.c.b16 %v2258, %v2257
  %v2271 = vpack.c.b16 %v2260, %v2259
  %v2272 = vpack.c.b16 %v2262, %v2261
  %v2273 = vpack.c.b16 %v2264, %v2263
  %v2274 = vpack.c.b16 %v2266, %v2265
  %2283 = vmatpush.bf16.msra.mxu0 %v2274
  %2284 = vmatpush.bf16.msra.mxu0 %v2273
  %2285 = vmatpush.bf16.msra.mxu0 %v2272
  %2286 = vmatpush.bf16.msra.mxu0 %v2271
  %2287 = vmatpush.bf16.msra.mxu0 %v2270
  %2288 = vmatpush.bf16.msra.mxu0 %v2269
  %2289 = vmatpush.bf16.msra.mxu0 %v2268
  %2290 = vmatpush.bf16.msra.mxu0 %v2267
  %2291 = vmatmul.bf16.gmra.mxu0 %v2234
  %v2292 = vpop.f32.mrf.mxu0
  %v2293 = vadd.f32 0.0, %v2292
  %v2294 = vpop.f32.mrf.mxu0
  %2295 = vdwg.mxu0
  %v2312 = vunpack.c.l.b16 %v2169
  %v2313 = vunpack.c.l.b16 %v2170
  %v2314 = vunpack.c.l.b16 %v2171
  %v2315 = vunpack.c.l.b16 %v2172
  %v2316 = vunpack.c.l.b16 %v2173
  %v2317 = vunpack.c.l.b16 %v2174
  %v2318 = vunpack.c.l.b16 %v2175
  %v2319 = vunpack.c.l.b16 %v2176
  %v2320 = vunpack.c.l.b16 %v2177
  %v2321 = vunpack.c.l.b16 %v2178
  %v2322 = vunpack.c.l.b16 %v2179
  %v2323 = vunpack.c.l.b16 %v2180
  %v2324 = vunpack.c.l.b16 %v2181
  %v2325 = vunpack.c.l.b16 %v2182
  %v2326 = vunpack.c.l.b16 %v2183
  %v2327 = vunpack.c.l.b16 %v2184
  %v2328 = vpack.c.b16 %v2313, %v2312
  %v2329 = vpack.c.b16 %v2315, %v2314
  %v2330 = vpack.c.b16 %v2317, %v2316
  %v2331 = vpack.c.b16 %v2319, %v2318
  %v2332 = vpack.c.b16 %v2321, %v2320
  %v2333 = vpack.c.b16 %v2323, %v2322
  %v2334 = vpack.c.b16 %v2325, %v2324
  %v2335 = vpack.c.b16 %v2327, %v2326
  %2344 = vmatpush.bf16.msra.mxu0 %v2335
  %2345 = vmatpush.bf16.msra.mxu0 %v2334
  %2346 = vmatpush.bf16.msra.mxu0 %v2333
  %2347 = vmatpush.bf16.msra.mxu0 %v2332
  %2348 = vmatpush.bf16.msra.mxu0 %v2331
  %2349 = vmatpush.bf16.msra.mxu0 %v2330
  %2350 = vmatpush.bf16.msra.mxu0 %v2329
  %2351 = vmatpush.bf16.msra.mxu0 %v2328
  %2352 = vmatmul.bf16.gmra.mxu0 %v2233
  %v2353 = vpop.f32.mrf.mxu0
  %v2354 = vadd.f32 %v2293, %v2353
  %v2355 = vpop.f32.mrf.mxu0
  %2356 = vdwg.mxu0
  %v2357 = vpack.c.bf16 %v2167, %v2167
  %v2374 = vunpack.c.l.b16 %v2201
  %v2375 = vunpack.c.l.b16 %v2202
  %v2376 = vunpack.c.l.b16 %v2203
  %v2377 = vunpack.c.l.b16 %v2204
  %v2378 = vunpack.c.l.b16 %v2205
  %v2379 = vunpack.c.l.b16 %v2206
  %v2380 = vunpack.c.l.b16 %v2207
  %v2381 = vunpack.c.l.b16 %v2208
  %v2382 = vunpack.c.l.b16 %v2209
  %v2383 = vunpack.c.l.b16 %v2210
  %v2384 = vunpack.c.l.b16 %v2211
  %v2385 = vunpack.c.l.b16 %v2212
  %v2386 = vunpack.c.l.b16 %v2213
  %v2387 = vunpack.c.l.b16 %v2214
  %v2388 = vunpack.c.l.b16 %v2215
  %v2389 = vunpack.c.l.b16 %v2216
  %v2390 = vpack.c.b16 %v2375, %v2374
  %v2391 = vpack.c.b16 %v2377, %v2376
  %v2392 = vpack.c.b16 %v2379, %v2378
  %v2393 = vpack.c.b16 %v2381, %v2380
  %v2394 = vpack.c.b16 %v2383, %v2382
  %v2395 = vpack.c.b16 %v2385, %v2384
  %v2396 = vpack.c.b16 %v2387, %v2386
  %v2397 = vpack.c.b16 %v2389, %v2388
  %2406 = vmatpush.bf16.msra.mxu0 %v2397
  %2407 = vmatpush.bf16.msra.mxu0 %v2396
  %2408 = vmatpush.bf16.msra.mxu0 %v2395
  %2409 = vmatpush.bf16.msra.mxu0 %v2394
  %2410 = vmatpush.bf16.msra.mxu0 %v2393
  %2411 = vmatpush.bf16.msra.mxu0 %v2392
  %2412 = vmatpush.bf16.msra.mxu0 %v2391
  %2413 = vmatpush.bf16.msra.mxu0 %v2390
  %2414 = vmatmul.bf16.gmra.mxu0 %v2357
  %v2415 = vpop.f32.mrf.mxu0
  %v2416 = vadd.f32 0.0, %v2415
  %v2417 = vpop.f32.mrf.mxu0
  %2418 = vdwg.mxu0
  %v2419 = vadd.f32 %v2354, %v2416
  %v2420 = vpack.c.bf16 %v2168, %v2168
  %v2437 = vunpack.c.l.b16 %v2217
  %v2438 = vunpack.c.l.b16 %v2218
  %v2439 = vunpack.c.l.b16 %v2219
  %v2440 = vunpack.c.l.b16 %v2220
  %v2441 = vunpack.c.l.b16 %v2221
  %v2442 = vunpack.c.l.b16 %v2222
  %v2443 = vunpack.c.l.b16 %v2223
  %v2444 = vunpack.c.l.b16 %v2224
  %v2445 = vunpack.c.l.b16 %v2225
  %v2446 = vunpack.c.l.b16 %v2226
  %v2447 = vunpack.c.l.b16 %v2227
  %v2448 = vunpack.c.l.b16 %v2228
  %v2449 = vunpack.c.l.b16 %v2229
  %v2450 = vunpack.c.l.b16 %v2230
  %v2451 = vunpack.c.l.b16 %v2231
  %v2452 = vunpack.c.l.b16 %v2232
  %v2453 = vpack.c.b16 %v2438, %v2437
  %v2454 = vpack.c.b16 %v2440, %v2439
  %v2455 = vpack.c.b16 %v2442, %v2441
  %v2456 = vpack.c.b16 %v2444, %v2443
  %v2457 = vpack.c.b16 %v2446, %v2445
  %v2458 = vpack.c.b16 %v2448, %v2447
  %v2459 = vpack.c.b16 %v2450, %v2449
  %v2460 = vpack.c.b16 %v2452, %v2451
  %2469 = vmatpush.bf16.msra.mxu0 %v2460
  %2470 = vmatpush.bf16.msra.mxu0 %v2459
  %2471 = vmatpush.bf16.msra.mxu0 %v2458
  %2472 = vmatpush.bf16.msra.mxu0 %v2457
  %2473 = vmatpush.bf16.msra.mxu0 %v2456
  %2474 = vmatpush.bf16.msra.mxu0 %v2455
  %2475 = vmatpush.bf16.msra.mxu0 %v2454
  %2476 = vmatpush.bf16.msra.mxu0 %v2453
  %2477 = vmatmul.bf16.gmra.mxu0 %v2420
  %v2478 = vpop.f32.mrf.mxu0
  %v2479 = vadd.f32 0.0, %v2478
  %v2480 = vpop.f32.mrf.mxu0
  %2481 = vdwg.mxu0
  %v2482 = vadd.f32 %v2419, %v2479
  %v2483 = vld [vmem:[%s6] sm:$0x1]
  %v2485 = vperm.slane %v2483, 0
  %v2487 = vadd.f32 %v2482, %v2485
  %v2488 = vmax.f32 %v2487, 0.0
  %v2489 = vpack.c.bf16 %v2488, %v2488
  %v2490 = vld [vmem:[%s7] sm:$0xf]
  %v2491 = vld [vmem:[%s7 + $0x4] sm:$0xf]
  %v2492 = vld [vmem:[%s7 + $0x8] sm:$0xf]
  %v2493 = vld [vmem:[%s7 + $0xc] sm:$0xf]
  %v2494 = vld [vmem:[%s8] sm:$0x1]
  %v2496 = vperm.slane %v2494, 0
  %v2502 = vunpack.c.l.b16 %v2490
  %v2503 = vunpack.c.l.b16 %v2491
  %v2504 = vunpack.c.l.b16 %v2492
  %v2505 = vunpack.c.l.b16 %v2493
  %v2506 = vpack.c.b16 %v2503, %v2502
  %v2507 = vpack.c.b16 %v2505, %v2504
  %vm2510 = vcmask 261120
  %v2512 = vsel %vm2510, %v2489, 0
  %2514 = vmatpush.bf16.msra.mxu0 0
  %2515 = vmatpush.bf16.msra.mxu0 0
  %2516 = vmatpush.bf16.msra.mxu0 0
  %2517 = vmatpush.bf16.msra.mxu0 0
  %2518 = vmatpush.bf16.msra.mxu0 0
  %2519 = vmatpush.bf16.msra.mxu0 0
  %2520 = vmatpush.bf16.msra.mxu0 %v2507
  %2521 = vmatpush.bf16.msra.mxu0 %v2506
  %2522 = vmatmul.bf16.gmra.mxu0 %v2512
  %v2523 = vpop.f32.mrf.mxu0
  %v2524 = vadd.f32 %v2496, %v2523
  %v2525 = vpop.f32.mrf.mxu0
  %2526 = vdwg.mxu0
  %2527 = vst [vmem:[%s9] sm:$0xff] %v2524
  // Predicated region
  $region38: #{sample_conv_net.1} parent=0 // pred_check
    _
  $region39: #{sample_conv_net.1} parent=0 // pred_check_branch
    %2529 = sbr.rel (0) target = $region41
  $region40: #{sample_conv_net.1} parent=0 // pred_region
    _
  $region41: #{sample_conv_net.1} parent=0 // pred_fallthru
    _
  // Predicated region
  $region42: #{sample_conv_net.1} parent=0 // pred_check
    _
  $region43: #{sample_conv_net.1} parent=0 // pred_check_branch
    %2531 = sbr.rel (0) target = $region45
  $region44: #{sample_conv_net.1} parent=0 // pred_region
    _
  $region45: #{sample_conv_net.1} parent=0 // pred_fallthru
    _

</llo_original>
